<compile_context>
chip_gen: v7x
topology: tpu7x:2x2x1
jax: 0.10.0
libtpu: 0.0.40
codegen_flags: <defaults>
</compile_context>

<pallas_src>
import jax
import jax.numpy as jnp
from jax import lax
from jax.experimental import pallas as pl
from jax.experimental.pallas import tpu as pltpu

D_IN = 39  # fixed by the module (input_size=39)


def _round_up(n, m):
    return ((n + m - 1) // m) * m


def _bigru_classifier_kernel(xcat_ref, wih_ref, bgi_ref, whh_ref, bhn_ref,
                             fcw_ref, fcb_ref, out_ref):
    T, BB, Dc = xcat_ref.shape          # Dc = 2 * 39 (fwd-time | reversed-time lanes)
    Gp = bhn_ref.shape[1]               # padded per-gate lane block: [fwd H | bwd H | 0]

    # (1) Input projection for both directions, off the serial path:
    #     one big MXU matmul; b_ih (and b_hh for r/z) already folded into bgi.
    x2d = xcat_ref[...].reshape(T * BB, Dc)
    gi = jnp.dot(x2d, wih_ref[...], preferred_element_type=jnp.float32) + bgi_ref[...]
    gi = gi.reshape(T, BB, 3 * Gp)      # gi[i]: fwd gates @ time i, bwd gates @ time T-1-i

    whh = whh_ref[...]                                   # (Gp, 3*Gp) block-diagonal fwd/bwd
    bhn = jnp.broadcast_to(bhn_ref[...], (BB, Gp))       # n-gate hidden bias, broadcast hoisted

    def step(i, h):
        # h carries [h_fwd | h_bwd | 0-pad] in a single lane-aligned (BB, Gp) tile.
        gi_t = gi[i]                                                    # (BB, 3*Gp)
        gh = jnp.dot(h, whh, preferred_element_type=jnp.float32)        # one matmul, both dirs
        r = jax.nn.sigmoid(gi_t[:, 0:Gp] + gh[:, 0:Gp])
        z = jax.nn.sigmoid(gi_t[:, Gp:2 * Gp] + gh[:, Gp:2 * Gp])
        n = jnp.tanh(gi_t[:, 2 * Gp:3 * Gp] + r * (gh[:, 2 * Gp:3 * Gp] + bhn))
        return (1.0 - z) * n + z * h

    h = jnp.zeros((BB, Gp), jnp.float32)
    if T <= 64:
        # Static trip count: fully unroll at trace time (gi indices become constants,
        # LLO sees across iterations).
        for i in range(T):
            h = step(i, h)
    else:
        h = lax.fori_loop(0, T, step, h, unroll=4)

    # fc(concat(h_fwd, h_bwd)) as one matmul against the (Gp, out)-padded fc weight.
    out = jnp.dot(h, fcw_ref[...], preferred_element_type=jnp.float32) + fcb_ref[...]
    out_ref[...] = out.astype(out_ref.dtype)


def _pack_params(params):
    """Repack GRU/FC weights into the fused, lane-padded layout the kernel uses."""
    wih_f, whh_f = params["wih_f"], params["whh_f"]
    bih_f, bhh_f = params["bih_f"], params["bhh_f"]
    wih_b, whh_b = params["wih_b"], params["whh_b"]
    bih_b, bhh_b = params["bih_b"], params["bhh_b"]
    fc_w, fc_b = params["fc_w"], params["fc_b"]
    H = whh_f.shape[0]
    out_dim = fc_w.shape[1]
    Gp = max(128, _round_up(2 * H, 128))   # per-gate lane block: [fwd H | bwd H | pad]

    wih_pack = jnp.zeros((2 * D_IN, 3 * Gp), jnp.float32)
    whh_pack = jnp.zeros((Gp, 3 * Gp), jnp.float32)
    bgi_pack = jnp.zeros((1, 3 * Gp), jnp.float32)
    for g in range(3):                      # gate order r, z, n (PyTorch packing)
        cf = g * Gp                         # fwd columns of this gate
        cb = g * Gp + H                     # bwd columns of this gate
        wih_pack = wih_pack.at[:D_IN, cf:cf + H].set(wih_f[:, g * H:(g + 1) * H])
        wih_pack = wih_pack.at[D_IN:, cb:cb + H].set(wih_b[:, g * H:(g + 1) * H])
        whh_pack = whh_pack.at[:H, cf:cf + H].set(whh_f[:, g * H:(g + 1) * H])
        whh_pack = whh_pack.at[H:2 * H, cb:cb + H].set(whh_b[:, g * H:(g + 1) * H])
        bf = bih_f[:, g * H:(g + 1) * H]
        bb = bih_b[:, g * H:(g + 1) * H]
        if g < 2:  # r, z: hidden bias is purely additive -> fold into the gi bias
            bf = bf + bhh_f[:, g * H:(g + 1) * H]
            bb = bb + bhh_b[:, g * H:(g + 1) * H]
        bgi_pack = bgi_pack.at[:, cf:cf + H].set(bf)
        bgi_pack = bgi_pack.at[:, cb:cb + H].set(bb)

    # n-gate hidden bias stays inside r * (gh_n + b_hn)  -> separate (1, Gp) vector.
    bhn_pack = jnp.zeros((1, Gp), jnp.float32)
    bhn_pack = bhn_pack.at[:, :H].set(bhh_f[:, 2 * H:])
    bhn_pack = bhn_pack.at[:, H:2 * H].set(bhh_b[:, 2 * H:])

    fcw_pack = jnp.zeros((Gp, out_dim), jnp.float32)
    fcw_pack = fcw_pack.at[:2 * H, :].set(fc_w)
    return wih_pack, bgi_pack, whh_pack, bhn_pack, fcw_pack, fc_b.astype(jnp.float32)


def bidirectional_gru_classifier(x, params):
    """x: (B, T, 39) (or any shape reshapable to (B, -1, 39)), float."""
    B = x.shape[0]
    x = x.reshape(B, -1, D_IN).astype(jnp.float32)       # torch: x.view(b, -1, 39)
    T = x.shape[1]
    wih, bgi, whh, bhn, fcw, fcb = _pack_params(params)
    out_dim = fcw.shape[1]

    # Pad batch to a sublane-friendly multiple of 8; BB is the per-grid-step tile.
    BB = min(_round_up(B, 8), 64)
    Bp = _round_up(B, BB)
    xp = x if Bp == B else jnp.zeros((Bp, T, D_IN), jnp.float32).at[:B].set(x)

    # Time-major, with the time-reversed copy concatenated on lanes: row t of xcat
    # holds exactly what fused step t needs (fwd input x[t], bwd input x[T-1-t]).
    xt = jnp.transpose(xp, (1, 0, 2))                    # (T, Bp, 39)
    xcat = jnp.concatenate([xt, xt[::-1]], axis=-1)      # (T, Bp, 78)

    nb = Bp // BB
    out = pl.pallas_call(
        _bigru_classifier_kernel,
        out_shape=jax.ShapeDtypeStruct((Bp, out_dim), jnp.float32),
        grid=(nb,),
        in_specs=[
            pl.BlockSpec((T, BB, 2 * D_IN), lambda b: (0, b, 0)),
            pl.BlockSpec(wih.shape, lambda b: (0, 0)),
            pl.BlockSpec(bgi.shape, lambda b: (0, 0)),
            pl.BlockSpec(whh.shape, lambda b: (0, 0)),
            pl.BlockSpec(bhn.shape, lambda b: (0, 0)),
            pl.BlockSpec(fcw.shape, lambda b: (0, 0)),
            pl.BlockSpec(fcb.shape, lambda b: (0, 0)),
        ],
        out_specs=pl.BlockSpec((BB, out_dim), lambda b: (b, 0)),
        compiler_params=pltpu.CompilerParams(
            dimension_semantics=("parallel",)),   # batch blocks shard across v7x cores
    )(xcat, wih, bgi, whh, bhn, fcw, fcb)
    return out[:B]


def init_params(key, hidden_dim=32, output_dim=41):
    """Deterministic init matching nn.GRU(39, H, bidirectional=True) + Linear(2H, out)."""
    H = hidden_dim
    ks = jax.random.split(key, 10)
    bound_gru = 1.0 / jnp.sqrt(H)
    bound_fc = 1.0 / jnp.sqrt(2 * H)
    u = lambda k, shape, b: jax.random.uniform(k, shape, jnp.float32, -b, b)
    return {
        # forward direction (weights stored transposed vs. PyTorch)
        "wih_f": u(ks[0], (D_IN, 3 * H), bound_gru),
        "whh_f": u(ks[1], (H, 3 * H), bound_gru),
        "bih_f": u(ks[2], (1, 3 * H), bound_gru),
        "bhh_f": u(ks[3], (1, 3 * H), bound_gru),
        # backward direction
        "wih_b": u(ks[4], (D_IN, 3 * H), bound_gru),
        "whh_b": u(ks[5], (H, 3 * H), bound_gru),
        "bih_b": u(ks[6], (1, 3 * H), bound_gru),
        "bhh_b": u(ks[7], (1, 3 * H), bound_gru),
        # classifier head
        "fc_w": u(ks[8], (2 * H, output_dim), bound_fc),
        "fc_b": u(ks[9], (1, output_dim), bound_fc),
    }


def _reference(x, params):
    """Pure-JAX reference of the same forward pass (for correctness check)."""
    B = x.shape[0]
    x = x.reshape(B, -1, D_IN).astype(jnp.float32)
    xt = jnp.transpose(x, (1, 0, 2))
    T = xt.shape[0]
    H = params["whh_f"].shape[0]

    def gru_dir(wih, whh, bih, bhh, reverse):
        h = jnp.zeros((B, H), jnp.float32)
        ts = range(T - 1, -1, -1) if reverse else range(T)
        for t in ts:
            gi = xt[t] @ wih + bih
            gh = h @ whh + bhh
            r = jax.nn.sigmoid(gi[:, :H] + gh[:, :H])
            z = jax.nn.sigmoid(gi[:, H:2 * H] + gh[:, H:2 * H])
            n = jnp.tanh(gi[:, 2 * H:] + r * gh[:, 2 * H:])
            h = (1.0 - z) * n + z * h
        return h

    h_f = gru_dir(params["wih_f"], params["whh_f"], params["bih_f"], params["bhh_f"], False)
    h_b = gru_dir(params["wih_b"], params["whh_b"], params["bih_b"], params["bhh_b"], True)
    return jnp.concatenate([h_f, h_b], axis=-1) @ params["fc_w"] + params["fc_b"]


if __name__ == "__main__":
    key = jax.random.PRNGKey(0)
    k_x, k_p = jax.random.split(key)

    B, T, H, OUT = 2, 8, 32, 41
    x = jax.random.normal(k_x, (B, T, D_IN), dtype=jnp.float32)
    params = init_params(k_p, hidden_dim=H, output_dim=OUT)

    out = bidirectional_gru_classifier(x, params)
    out = jax.block_until_ready(out)

    ref = _reference(x, params)
    assert out.shape == (B, OUT)
    assert jnp.allclose(out, ref, atol=1e-4, rtol=1e-4), "mismatch vs pure-JAX reference"

    print("KERNEL_OK")
</pallas_src>

<mosaic_0001>
module attributes {stable_mosaic.version = 11 : i64} {
  func.func @_bigru_classifier_kernel(%arg0: i32, %arg1: memref<8x8x78xf32, #tpu.memory_space<vmem>>, %arg2: memref<78x384xf32, #tpu.memory_space<vmem>>, %arg3: memref<1x384xf32, #tpu.memory_space<vmem>>, %arg4: memref<128x384xf32, #tpu.memory_space<vmem>>, %arg5: memref<1x128xf32, #tpu.memory_space<vmem>>, %arg6: memref<128x41xf32, #tpu.memory_space<vmem>>, %arg7: memref<1x41xf32, #tpu.memory_space<vmem>>, %arg8: memref<8x41xf32, #tpu.memory_space<vmem>>) attributes {dimension_semantics = [#tpu.dimension_semantics<parallel>], iteration_bounds = array<i64: 1>, scalar_prefetch = 0 : i64, scratch_operands = 0 : i64, tpu.core_type = #tpu.core_type<tc>, window_params = [{transform_indices = @transform_0, window_bounds = array<i64: 8, 8, 78>}, {pipeline_mode = #tpu.pipeline_mode<synchronous>, transform_indices = @transform_1, window_bounds = array<i64: 78, 384>}, {pipeline_mode = #tpu.pipeline_mode<synchronous>, transform_indices = @transform_2, window_bounds = array<i64: 1, 384>}, {pipeline_mode = #tpu.pipeline_mode<synchronous>, transform_indices = @transform_3, window_bounds = array<i64: 128, 384>}, {pipeline_mode = #tpu.pipeline_mode<synchronous>, transform_indices = @transform_4, window_bounds = array<i64: 1, 128>}, {pipeline_mode = #tpu.pipeline_mode<synchronous>, transform_indices = @transform_5, window_bounds = array<i64: 128, 41>}, {pipeline_mode = #tpu.pipeline_mode<synchronous>, transform_indices = @transform_6, window_bounds = array<i64: 1, 41>}, {transform_indices = @transform_7, window_bounds = array<i64: 8, 41>}]} {
    %c0 = arith.constant 0 : index
    %c0_0 = arith.constant 0 : index
    %c0_1 = arith.constant 0 : index
    %0 = vector.load %arg1[%c0, %c0_0, %c0_1] : memref<8x8x78xf32, #tpu.memory_space<vmem>>, vector<8x8x78xf32>
    %1 = vector.shape_cast %0 : vector<8x8x78xf32> to vector<64x78xf32>
    %c0_2 = arith.constant 0 : index
    %c0_3 = arith.constant 0 : index
    %2 = vector.load %arg2[%c0_2, %c0_3] : memref<78x384xf32, #tpu.memory_space<vmem>>, vector<78x384xf32>
    %cst = arith.constant dense<0.000000e+00> : vector<64x384xf32>
    %3 = tpu.matmul %1, %2, %cst {dimension_numbers = #tpu.dot_dimension_numbers<[1], [0], [0], [1], [0, 0, 1, 1], [], []>} : vector<64x78xf32>, vector<78x384xf32>, vector<64x384xf32> -> vector<64x384xf32>
    %c0_4 = arith.constant 0 : index
    %c0_5 = arith.constant 0 : index
    %4 = vector.load %arg3[%c0_4, %c0_5] : memref<1x384xf32, #tpu.memory_space<vmem>>, vector<1x384xf32>
    %5 = vector.broadcast %4 : vector<1x384xf32> to vector<64x384xf32>
    %6 = arith.addf %3, %5 : vector<64x384xf32>
    %7 = vector.shape_cast %6 : vector<64x384xf32> to vector<8x8x384xf32>
    %c0_6 = arith.constant 0 : index
    %c0_7 = arith.constant 0 : index
    %8 = vector.load %arg4[%c0_6, %c0_7] : memref<128x384xf32, #tpu.memory_space<vmem>>, vector<128x384xf32>
    %c0_8 = arith.constant 0 : index
    %c0_9 = arith.constant 0 : index
    %9 = vector.load %arg5[%c0_8, %c0_9] : memref<1x128xf32, #tpu.memory_space<vmem>>, vector<1x128xf32>
    %10 = vector.shape_cast %9 : vector<1x128xf32> to vector<1x128xf32>
    %11 = vector.broadcast %10 : vector<1x128xf32> to vector<8x128xf32>
    %cst_10 = arith.constant 0.000000e+00 : f32
    %12 = vector.broadcast %cst_10 : f32 to vector<8x128xf32>
    %13 = vector.extract_strided_slice %7 {offsets = [0, 0, 0], sizes = [1, 8, 384], strides = [1, 1, 1]} : vector<8x8x384xf32> to vector<1x8x384xf32>
    %14 = vector.shape_cast %13 : vector<1x8x384xf32> to vector<8x384xf32>
    %cst_11 = arith.constant dense<0.000000e+00> : vector<8x384xf32>
    %15 = tpu.matmul %12, %8, %cst_11 {dimension_numbers = #tpu.dot_dimension_numbers<[1], [0], [0], [1], [0, 0, 1, 1], [], []>} : vector<8x128xf32>, vector<128x384xf32>, vector<8x384xf32> -> vector<8x384xf32>
    %16 = vector.extract_strided_slice %14 {offsets = [0, 0], sizes = [8, 128], strides = [1, 1]} : vector<8x384xf32> to vector<8x128xf32>
    %17 = vector.extract_strided_slice %15 {offsets = [0, 0], sizes = [8, 128], strides = [1, 1]} : vector<8x384xf32> to vector<8x128xf32>
    %18 = arith.addf %16, %17 : vector<8x128xf32>
    %19 = arith.negf %18 : vector<8x128xf32>
    %20 = math.exp %19 : vector<8x128xf32>
    %cst_12 = arith.constant 1.000000e+00 : f32
    %21 = vector.broadcast %cst_12 : f32 to vector<8x128xf32>
    %22 = arith.addf %21, %20 : vector<8x128xf32>
    %23 = arith.divf %21, %22 : vector<8x128xf32>
    %24 = vector.extract_strided_slice %14 {offsets = [0, 128], sizes = [8, 128], strides = [1, 1]} : vector<8x384xf32> to vector<8x128xf32>
    %25 = vector.extract_strided_slice %15 {offsets = [0, 128], sizes = [8, 128], strides = [1, 1]} : vector<8x384xf32> to vector<8x128xf32>
    %26 = arith.addf %24, %25 : vector<8x128xf32>
    %27 = arith.negf %26 : vector<8x128xf32>
    %28 = math.exp %27 : vector<8x128xf32>
    %cst_13 = arith.constant 1.000000e+00 : f32
    %29 = vector.broadcast %cst_13 : f32 to vector<8x128xf32>
    %30 = arith.addf %29, %28 : vector<8x128xf32>
    %31 = arith.divf %29, %30 : vector<8x128xf32>
    %32 = vector.extract_strided_slice %14 {offsets = [0, 256], sizes = [8, 128], strides = [1, 1]} : vector<8x384xf32> to vector<8x128xf32>
    %33 = vector.extract_strided_slice %15 {offsets = [0, 256], sizes = [8, 128], strides = [1, 1]} : vector<8x384xf32> to vector<8x128xf32>
    %34 = arith.addf %33, %11 : vector<8x128xf32>
    %35 = arith.mulf %23, %34 : vector<8x128xf32>
    %36 = arith.addf %32, %35 : vector<8x128xf32>
    %37 = math.tanh %36 : vector<8x128xf32>
    %cst_14 = arith.constant 1.000000e+00 : f32
    %38 = vector.broadcast %cst_14 : f32 to vector<8x128xf32>
    %39 = arith.subf %38, %31 : vector<8x128xf32>
    %40 = arith.mulf %39, %37 : vector<8x128xf32>
    %41 = arith.mulf %31, %12 : vector<8x128xf32>
    %42 = arith.addf %40, %41 : vector<8x128xf32>
    %43 = vector.extract_strided_slice %7 {offsets = [1, 0, 0], sizes = [1, 8, 384], strides = [1, 1, 1]} : vector<8x8x384xf32> to vector<1x8x384xf32>
    %44 = vector.shape_cast %43 : vector<1x8x384xf32> to vector<8x384xf32>
    %cst_15 = arith.constant dense<0.000000e+00> : vector<8x384xf32>
    %45 = tpu.matmul %42, %8, %cst_15 {dimension_numbers = #tpu.dot_dimension_numbers<[1], [0], [0], [1], [0, 0, 1, 1], [], []>} : vector<8x128xf32>, vector<128x384xf32>, vector<8x384xf32> -> vector<8x384xf32>
    %46 = vector.extract_strided_slice %44 {offsets = [0, 0], sizes = [8, 128], strides = [1, 1]} : vector<8x384xf32> to vector<8x128xf32>
    %47 = vector.extract_strided_slice %45 {offsets = [0, 0], sizes = [8, 128], strides = [1, 1]} : vector<8x384xf32> to vector<8x128xf32>
    %48 = arith.addf %46, %47 : vector<8x128xf32>
    %49 = arith.negf %48 : vector<8x128xf32>
    %50 = math.exp %49 : vector<8x128xf32>
    %cst_16 = arith.constant 1.000000e+00 : f32
    %51 = vector.broadcast %cst_16 : f32 to vector<8x128xf32>
    %52 = arith.addf %51, %50 : vector<8x128xf32>
    %53 = arith.divf %51, %52 : vector<8x128xf32>
    %54 = vector.extract_strided_slice %44 {offsets = [0, 128], sizes = [8, 128], strides = [1, 1]} : vector<8x384xf32> to vector<8x128xf32>
    %55 = vector.extract_strided_slice %45 {offsets = [0, 128], sizes = [8, 128], strides = [1, 1]} : vector<8x384xf32> to vector<8x128xf32>
    %56 = arith.addf %54, %55 : vector<8x128xf32>
    %57 = arith.negf %56 : vector<8x128xf32>
    %58 = math.exp %57 : vector<8x128xf32>
    %cst_17 = arith.constant 1.000000e+00 : f32
    %59 = vector.broadcast %cst_17 : f32 to vector<8x128xf32>
    %60 = arith.addf %59, %58 : vector<8x128xf32>
    %61 = arith.divf %59, %60 : vector<8x128xf32>
    %62 = vector.extract_strided_slice %44 {offsets = [0, 256], sizes = [8, 128], strides = [1, 1]} : vector<8x384xf32> to vector<8x128xf32>
    %63 = vector.extract_strided_slice %45 {offsets = [0, 256], sizes = [8, 128], strides = [1, 1]} : vector<8x384xf32> to vector<8x128xf32>
    %64 = arith.addf %63, %11 : vector<8x128xf32>
    %65 = arith.mulf %53, %64 : vector<8x128xf32>
    %66 = arith.addf %62, %65 : vector<8x128xf32>
    %67 = math.tanh %66 : vector<8x128xf32>
    %cst_18 = arith.constant 1.000000e+00 : f32
    %68 = vector.broadcast %cst_18 : f32 to vector<8x128xf32>
    %69 = arith.subf %68, %61 : vector<8x128xf32>
    %70 = arith.mulf %69, %67 : vector<8x128xf32>
    %71 = arith.mulf %61, %42 : vector<8x128xf32>
    %72 = arith.addf %70, %71 : vector<8x128xf32>
    %73 = vector.extract_strided_slice %7 {offsets = [2, 0, 0], sizes = [1, 8, 384], strides = [1, 1, 1]} : vector<8x8x384xf32> to vector<1x8x384xf32>
    %74 = vector.shape_cast %73 : vector<1x8x384xf32> to vector<8x384xf32>
    %cst_19 = arith.constant dense<0.000000e+00> : vector<8x384xf32>
    %75 = tpu.matmul %72, %8, %cst_19 {dimension_numbers = #tpu.dot_dimension_numbers<[1], [0], [0], [1], [0, 0, 1, 1], [], []>} : vector<8x128xf32>, vector<128x384xf32>, vector<8x384xf32> -> vector<8x384xf32>
    %76 = vector.extract_strided_slice %74 {offsets = [0, 0], sizes = [8, 128], strides = [1, 1]} : vector<8x384xf32> to vector<8x128xf32>
    %77 = vector.extract_strided_slice %75 {offsets = [0, 0], sizes = [8, 128], strides = [1, 1]} : vector<8x384xf32> to vector<8x128xf32>
    %78 = arith.addf %76, %77 : vector<8x128xf32>
    %79 = arith.negf %78 : vector<8x128xf32>
    %80 = math.exp %79 : vector<8x128xf32>
    %cst_20 = arith.constant 1.000000e+00 : f32
    %81 = vector.broadcast %cst_20 : f32 to vector<8x128xf32>
    %82 = arith.addf %81, %80 : vector<8x128xf32>
    %83 = arith.divf %81, %82 : vector<8x128xf32>
    %84 = vector.extract_strided_slice %74 {offsets = [0, 128], sizes = [8, 128], strides = [1, 1]} : vector<8x384xf32> to vector<8x128xf32>
    %85 = vector.extract_strided_slice %75 {offsets = [0, 128], sizes = [8, 128], strides = [1, 1]} : vector<8x384xf32> to vector<8x128xf32>
    %86 = arith.addf %84, %85 : vector<8x128xf32>
    %87 = arith.negf %86 : vector<8x128xf32>
    %88 = math.exp %87 : vector<8x128xf32>
    %cst_21 = arith.constant 1.000000e+00 : f32
    %89 = vector.broadcast %cst_21 : f32 to vector<8x128xf32>
    %90 = arith.addf %89, %88 : vector<8x128xf32>
    %91 = arith.divf %89, %90 : vector<8x128xf32>
    %92 = vector.extract_strided_slice %74 {offsets = [0, 256], sizes = [8, 128], strides = [1, 1]} : vector<8x384xf32> to vector<8x128xf32>
    %93 = vector.extract_strided_slice %75 {offsets = [0, 256], sizes = [8, 128], strides = [1, 1]} : vector<8x384xf32> to vector<8x128xf32>
    %94 = arith.addf %93, %11 : vector<8x128xf32>
    %95 = arith.mulf %83, %94 : vector<8x128xf32>
    %96 = arith.addf %92, %95 : vector<8x128xf32>
    %97 = math.tanh %96 : vector<8x128xf32>
    %cst_22 = arith.constant 1.000000e+00 : f32
    %98 = vector.broadcast %cst_22 : f32 to vector<8x128xf32>
    %99 = arith.subf %98, %91 : vector<8x128xf32>
    %100 = arith.mulf %99, %97 : vector<8x128xf32>
    %101 = arith.mulf %91, %72 : vector<8x128xf32>
    %102 = arith.addf %100, %101 : vector<8x128xf32>
    %103 = vector.extract_strided_slice %7 {offsets = [3, 0, 0], sizes = [1, 8, 384], strides = [1, 1, 1]} : vector<8x8x384xf32> to vector<1x8x384xf32>
    %104 = vector.shape_cast %103 : vector<1x8x384xf32> to vector<8x384xf32>
    %cst_23 = arith.constant dense<0.000000e+00> : vector<8x384xf32>
    %105 = tpu.matmul %102, %8, %cst_23 {dimension_numbers = #tpu.dot_dimension_numbers<[1], [0], [0], [1], [0, 0, 1, 1], [], []>} : vector<8x128xf32>, vector<128x384xf32>, vector<8x384xf32> -> vector<8x384xf32>
    %106 = vector.extract_strided_slice %104 {offsets = [0, 0], sizes = [8, 128], strides = [1, 1]} : vector<8x384xf32> to vector<8x128xf32>
    %107 = vector.extract_strided_slice %105 {offsets = [0, 0], sizes = [8, 128], strides = [1, 1]} : vector<8x384xf32> to vector<8x128xf32>
    %108 = arith.addf %106, %107 : vector<8x128xf32>
    %109 = arith.negf %108 : vector<8x128xf32>
    %110 = math.exp %109 : vector<8x128xf32>
    %cst_24 = arith.constant 1.000000e+00 : f32
    %111 = vector.broadcast %cst_24 : f32 to vector<8x128xf32>
    %112 = arith.addf %111, %110 : vector<8x128xf32>
    %113 = arith.divf %111, %112 : vector<8x128xf32>
    %114 = vector.extract_strided_slice %104 {offsets = [0, 128], sizes = [8, 128], strides = [1, 1]} : vector<8x384xf32> to vector<8x128xf32>
    %115 = vector.extract_strided_slice %105 {offsets = [0, 128], sizes = [8, 128], strides = [1, 1]} : vector<8x384xf32> to vector<8x128xf32>
    %116 = arith.addf %114, %115 : vector<8x128xf32>
    %117 = arith.negf %116 : vector<8x128xf32>
    %118 = math.exp %117 : vector<8x128xf32>
    %cst_25 = arith.constant 1.000000e+00 : f32
    %119 = vector.broadcast %cst_25 : f32 to vector<8x128xf32>
    %120 = arith.addf %119, %118 : vector<8x128xf32>
    %121 = arith.divf %119, %120 : vector<8x128xf32>
    %122 = vector.extract_strided_slice %104 {offsets = [0, 256], sizes = [8, 128], strides = [1, 1]} : vector<8x384xf32> to vector<8x128xf32>
    %123 = vector.extract_strided_slice %105 {offsets = [0, 256], sizes = [8, 128], strides = [1, 1]} : vector<8x384xf32> to vector<8x128xf32>
    %124 = arith.addf %123, %11 : vector<8x128xf32>
    %125 = arith.mulf %113, %124 : vector<8x128xf32>
    %126 = arith.addf %122, %125 : vector<8x128xf32>
    %127 = math.tanh %126 : vector<8x128xf32>
    %cst_26 = arith.constant 1.000000e+00 : f32
    %128 = vector.broadcast %cst_26 : f32 to vector<8x128xf32>
    %129 = arith.subf %128, %121 : vector<8x128xf32>
    %130 = arith.mulf %129, %127 : vector<8x128xf32>
    %131 = arith.mulf %121, %102 : vector<8x128xf32>
    %132 = arith.addf %130, %131 : vector<8x128xf32>
    %133 = vector.extract_strided_slice %7 {offsets = [4, 0, 0], sizes = [1, 8, 384], strides = [1, 1, 1]} : vector<8x8x384xf32> to vector<1x8x384xf32>
    %134 = vector.shape_cast %133 : vector<1x8x384xf32> to vector<8x384xf32>
    %cst_27 = arith.constant dense<0.000000e+00> : vector<8x384xf32>
    %135 = tpu.matmul %132, %8, %cst_27 {dimension_numbers = #tpu.dot_dimension_numbers<[1], [0], [0], [1], [0, 0, 1, 1], [], []>} : vector<8x128xf32>, vector<128x384xf32>, vector<8x384xf32> -> vector<8x384xf32>
    %136 = vector.extract_strided_slice %134 {offsets = [0, 0], sizes = [8, 128], strides = [1, 1]} : vector<8x384xf32> to vector<8x128xf32>
    %137 = vector.extract_strided_slice %135 {offsets = [0, 0], sizes = [8, 128], strides = [1, 1]} : vector<8x384xf32> to vector<8x128xf32>
    %138 = arith.addf %136, %137 : vector<8x128xf32>
    %139 = arith.negf %138 : vector<8x128xf32>
    %140 = math.exp %139 : vector<8x128xf32>
    %cst_28 = arith.constant 1.000000e+00 : f32
    %141 = vector.broadcast %cst_28 : f32 to vector<8x128xf32>
    %142 = arith.addf %141, %140 : vector<8x128xf32>
    %143 = arith.divf %141, %142 : vector<8x128xf32>
    %144 = vector.extract_strided_slice %134 {offsets = [0, 128], sizes = [8, 128], strides = [1, 1]} : vector<8x384xf32> to vector<8x128xf32>
    %145 = vector.extract_strided_slice %135 {offsets = [0, 128], sizes = [8, 128], strides = [1, 1]} : vector<8x384xf32> to vector<8x128xf32>
    %146 = arith.addf %144, %145 : vector<8x128xf32>
    %147 = arith.negf %146 : vector<8x128xf32>
    %148 = math.exp %147 : vector<8x128xf32>
    %cst_29 = arith.constant 1.000000e+00 : f32
    %149 = vector.broadcast %cst_29 : f32 to vector<8x128xf32>
    %150 = arith.addf %149, %148 : vector<8x128xf32>
    %151 = arith.divf %149, %150 : vector<8x128xf32>
    %152 = vector.extract_strided_slice %134 {offsets = [0, 256], sizes = [8, 128], strides = [1, 1]} : vector<8x384xf32> to vector<8x128xf32>
    %153 = vector.extract_strided_slice %135 {offsets = [0, 256], sizes = [8, 128], strides = [1, 1]} : vector<8x384xf32> to vector<8x128xf32>
    %154 = arith.addf %153, %11 : vector<8x128xf32>
    %155 = arith.mulf %143, %154 : vector<8x128xf32>
    %156 = arith.addf %152, %155 : vector<8x128xf32>
    %157 = math.tanh %156 : vector<8x128xf32>
    %cst_30 = arith.constant 1.000000e+00 : f32
    %158 = vector.broadcast %cst_30 : f32 to vector<8x128xf32>
    %159 = arith.subf %158, %151 : vector<8x128xf32>
    %160 = arith.mulf %159, %157 : vector<8x128xf32>
    %161 = arith.mulf %151, %132 : vector<8x128xf32>
    %162 = arith.addf %160, %161 : vector<8x128xf32>
    %163 = vector.extract_strided_slice %7 {offsets = [5, 0, 0], sizes = [1, 8, 384], strides = [1, 1, 1]} : vector<8x8x384xf32> to vector<1x8x384xf32>
    %164 = vector.shape_cast %163 : vector<1x8x384xf32> to vector<8x384xf32>
    %cst_31 = arith.constant dense<0.000000e+00> : vector<8x384xf32>
    %165 = tpu.matmul %162, %8, %cst_31 {dimension_numbers = #tpu.dot_dimension_numbers<[1], [0], [0], [1], [0, 0, 1, 1], [], []>} : vector<8x128xf32>, vector<128x384xf32>, vector<8x384xf32> -> vector<8x384xf32>
    %166 = vector.extract_strided_slice %164 {offsets = [0, 0], sizes = [8, 128], strides = [1, 1]} : vector<8x384xf32> to vector<8x128xf32>
    %167 = vector.extract_strided_slice %165 {offsets = [0, 0], sizes = [8, 128], strides = [1, 1]} : vector<8x384xf32> to vector<8x128xf32>
    %168 = arith.addf %166, %167 : vector<8x128xf32>
    %169 = arith.negf %168 : vector<8x128xf32>
    %170 = math.exp %169 : vector<8x128xf32>
    %cst_32 = arith.constant 1.000000e+00 : f32
    %171 = vector.broadcast %cst_32 : f32 to vector<8x128xf32>
    %172 = arith.addf %171, %170 : vector<8x128xf32>
    %173 = arith.divf %171, %172 : vector<8x128xf32>
    %174 = vector.extract_strided_slice %164 {offsets = [0, 128], sizes = [8, 128], strides = [1, 1]} : vector<8x384xf32> to vector<8x128xf32>
    %175 = vector.extract_strided_slice %165 {offsets = [0, 128], sizes = [8, 128], strides = [1, 1]} : vector<8x384xf32> to vector<8x128xf32>
    %176 = arith.addf %174, %175 : vector<8x128xf32>
    %177 = arith.negf %176 : vector<8x128xf32>
    %178 = math.exp %177 : vector<8x128xf32>
    %cst_33 = arith.constant 1.000000e+00 : f32
    %179 = vector.broadcast %cst_33 : f32 to vector<8x128xf32>
    %180 = arith.addf %179, %178 : vector<8x128xf32>
    %181 = arith.divf %179, %180 : vector<8x128xf32>
    %182 = vector.extract_strided_slice %164 {offsets = [0, 256], sizes = [8, 128], strides = [1, 1]} : vector<8x384xf32> to vector<8x128xf32>
    %183 = vector.extract_strided_slice %165 {offsets = [0, 256], sizes = [8, 128], strides = [1, 1]} : vector<8x384xf32> to vector<8x128xf32>
    %184 = arith.addf %183, %11 : vector<8x128xf32>
    %185 = arith.mulf %173, %184 : vector<8x128xf32>
    %186 = arith.addf %182, %185 : vector<8x128xf32>
    %187 = math.tanh %186 : vector<8x128xf32>
    %cst_34 = arith.constant 1.000000e+00 : f32
    %188 = vector.broadcast %cst_34 : f32 to vector<8x128xf32>
    %189 = arith.subf %188, %181 : vector<8x128xf32>
    %190 = arith.mulf %189, %187 : vector<8x128xf32>
    %191 = arith.mulf %181, %162 : vector<8x128xf32>
    %192 = arith.addf %190, %191 : vector<8x128xf32>
    %193 = vector.extract_strided_slice %7 {offsets = [6, 0, 0], sizes = [1, 8, 384], strides = [1, 1, 1]} : vector<8x8x384xf32> to vector<1x8x384xf32>
    %194 = vector.shape_cast %193 : vector<1x8x384xf32> to vector<8x384xf32>
    %cst_35 = arith.constant dense<0.000000e+00> : vector<8x384xf32>
    %195 = tpu.matmul %192, %8, %cst_35 {dimension_numbers = #tpu.dot_dimension_numbers<[1], [0], [0], [1], [0, 0, 1, 1], [], []>} : vector<8x128xf32>, vector<128x384xf32>, vector<8x384xf32> -> vector<8x384xf32>
    %196 = vector.extract_strided_slice %194 {offsets = [0, 0], sizes = [8, 128], strides = [1, 1]} : vector<8x384xf32> to vector<8x128xf32>
    %197 = vector.extract_strided_slice %195 {offsets = [0, 0], sizes = [8, 128], strides = [1, 1]} : vector<8x384xf32> to vector<8x128xf32>
    %198 = arith.addf %196, %197 : vector<8x128xf32>
    %199 = arith.negf %198 : vector<8x128xf32>
    %200 = math.exp %199 : vector<8x128xf32>
    %cst_36 = arith.constant 1.000000e+00 : f32
    %201 = vector.broadcast %cst_36 : f32 to vector<8x128xf32>
    %202 = arith.addf %201, %200 : vector<8x128xf32>
    %203 = arith.divf %201, %202 : vector<8x128xf32>
    %204 = vector.extract_strided_slice %194 {offsets = [0, 128], sizes = [8, 128], strides = [1, 1]} : vector<8x384xf32> to vector<8x128xf32>
    %205 = vector.extract_strided_slice %195 {offsets = [0, 128], sizes = [8, 128], strides = [1, 1]} : vector<8x384xf32> to vector<8x128xf32>
    %206 = arith.addf %204, %205 : vector<8x128xf32>
    %207 = arith.negf %206 : vector<8x128xf32>
    %208 = math.exp %207 : vector<8x128xf32>
    %cst_37 = arith.constant 1.000000e+00 : f32
    %209 = vector.broadcast %cst_37 : f32 to vector<8x128xf32>
    %210 = arith.addf %209, %208 : vector<8x128xf32>
    %211 = arith.divf %209, %210 : vector<8x128xf32>
    %212 = vector.extract_strided_slice %194 {offsets = [0, 256], sizes = [8, 128], strides = [1, 1]} : vector<8x384xf32> to vector<8x128xf32>
    %213 = vector.extract_strided_slice %195 {offsets = [0, 256], sizes = [8, 128], strides = [1, 1]} : vector<8x384xf32> to vector<8x128xf32>
    %214 = arith.addf %213, %11 : vector<8x128xf32>
    %215 = arith.mulf %203, %214 : vector<8x128xf32>
    %216 = arith.addf %212, %215 : vector<8x128xf32>
    %217 = math.tanh %216 : vector<8x128xf32>
    %cst_38 = arith.constant 1.000000e+00 : f32
    %218 = vector.broadcast %cst_38 : f32 to vector<8x128xf32>
    %219 = arith.subf %218, %211 : vector<8x128xf32>
    %220 = arith.mulf %219, %217 : vector<8x128xf32>
    %221 = arith.mulf %211, %192 : vector<8x128xf32>
    %222 = arith.addf %220, %221 : vector<8x128xf32>
    %223 = vector.extract_strided_slice %7 {offsets = [7, 0, 0], sizes = [1, 8, 384], strides = [1, 1, 1]} : vector<8x8x384xf32> to vector<1x8x384xf32>
    %224 = vector.shape_cast %223 : vector<1x8x384xf32> to vector<8x384xf32>
    %cst_39 = arith.constant dense<0.000000e+00> : vector<8x384xf32>
    %225 = tpu.matmul %222, %8, %cst_39 {dimension_numbers = #tpu.dot_dimension_numbers<[1], [0], [0], [1], [0, 0, 1, 1], [], []>} : vector<8x128xf32>, vector<128x384xf32>, vector<8x384xf32> -> vector<8x384xf32>
    %226 = vector.extract_strided_slice %224 {offsets = [0, 0], sizes = [8, 128], strides = [1, 1]} : vector<8x384xf32> to vector<8x128xf32>
    %227 = vector.extract_strided_slice %225 {offsets = [0, 0], sizes = [8, 128], strides = [1, 1]} : vector<8x384xf32> to vector<8x128xf32>
    %228 = arith.addf %226, %227 : vector<8x128xf32>
    %229 = arith.negf %228 : vector<8x128xf32>
    %230 = math.exp %229 : vector<8x128xf32>
    %cst_40 = arith.constant 1.000000e+00 : f32
    %231 = vector.broadcast %cst_40 : f32 to vector<8x128xf32>
    %232 = arith.addf %231, %230 : vector<8x128xf32>
    %233 = arith.divf %231, %232 : vector<8x128xf32>
    %234 = vector.extract_strided_slice %224 {offsets = [0, 128], sizes = [8, 128], strides = [1, 1]} : vector<8x384xf32> to vector<8x128xf32>
    %235 = vector.extract_strided_slice %225 {offsets = [0, 128], sizes = [8, 128], strides = [1, 1]} : vector<8x384xf32> to vector<8x128xf32>
    %236 = arith.addf %234, %235 : vector<8x128xf32>
    %237 = arith.negf %236 : vector<8x128xf32>
    %238 = math.exp %237 : vector<8x128xf32>
    %cst_41 = arith.constant 1.000000e+00 : f32
    %239 = vector.broadcast %cst_41 : f32 to vector<8x128xf32>
    %240 = arith.addf %239, %238 : vector<8x128xf32>
    %241 = arith.divf %239, %240 : vector<8x128xf32>
    %242 = vector.extract_strided_slice %224 {offsets = [0, 256], sizes = [8, 128], strides = [1, 1]} : vector<8x384xf32> to vector<8x128xf32>
    %243 = vector.extract_strided_slice %225 {offsets = [0, 256], sizes = [8, 128], strides = [1, 1]} : vector<8x384xf32> to vector<8x128xf32>
    %244 = arith.addf %243, %11 : vector<8x128xf32>
    %245 = arith.mulf %233, %244 : vector<8x128xf32>
    %246 = arith.addf %242, %245 : vector<8x128xf32>
    %247 = math.tanh %246 : vector<8x128xf32>
    %cst_42 = arith.constant 1.000000e+00 : f32
    %248 = vector.broadcast %cst_42 : f32 to vector<8x128xf32>
    %249 = arith.subf %248, %241 : vector<8x128xf32>
    %250 = arith.mulf %249, %247 : vector<8x128xf32>
    %251 = arith.mulf %241, %222 : vector<8x128xf32>
    %252 = arith.addf %250, %251 : vector<8x128xf32>
    %c0_43 = arith.constant 0 : index
    %c0_44 = arith.constant 0 : index
    %253 = vector.load %arg6[%c0_43, %c0_44] : memref<128x41xf32, #tpu.memory_space<vmem>>, vector<128x41xf32>
    %cst_45 = arith.constant dense<0.000000e+00> : vector<8x41xf32>
    %254 = tpu.matmul %252, %253, %cst_45 {dimension_numbers = #tpu.dot_dimension_numbers<[1], [0], [0], [1], [0, 0, 1, 1], [], []>} : vector<8x128xf32>, vector<128x41xf32>, vector<8x41xf32> -> vector<8x41xf32>
    %c0_46 = arith.constant 0 : index
    %c0_47 = arith.constant 0 : index
    %255 = vector.load %arg7[%c0_46, %c0_47] : memref<1x41xf32, #tpu.memory_space<vmem>>, vector<1x41xf32>
    %256 = vector.broadcast %255 : vector<1x41xf32> to vector<8x41xf32>
    %257 = arith.addf %254, %256 : vector<8x41xf32>
    %c0_48 = arith.constant 0 : index
    %c0_49 = arith.constant 0 : index
    %258 = vector.load %arg8[%c0_48, %c0_49] : memref<8x41xf32, #tpu.memory_space<vmem>>, vector<8x41xf32>
    tpu.vector_store %arg8[%c0_48, %c0_49], %257 {strides = array<i32>} : memref<8x41xf32, #tpu.memory_space<vmem>>, vector<8x41xf32>,
    return
  }
  func.func @transform_0(%arg0: i32) -> (i32, i32, i32) {
    %c0_i32 = arith.constant 0 : i32
    %c0_i32_0 = arith.constant 0 : i32
    %c0_i32_1 = arith.constant 0 : i32
    return %c0_i32, %arg0, %c0_i32_0 : i32, i32, i32
  }
  func.func @transform_1(%arg0: i32) -> (i32, i32) {
    %c0_i32 = arith.constant 0 : i32
    %c0_i32_0 = arith.constant 0 : i32
    %c0_i32_1 = arith.constant 0 : i32
    return %c0_i32, %c0_i32_0 : i32, i32
  }
  func.func @transform_2(%arg0: i32) -> (i32, i32) {
    %c0_i32 = arith.constant 0 : i32
    %c0_i32_0 = arith.constant 0 : i32
    %c0_i32_1 = arith.constant 0 : i32
    return %c0_i32, %c0_i32_0 : i32, i32
  }
  func.func @transform_3(%arg0: i32) -> (i32, i32) {
    %c0_i32 = arith.constant 0 : i32
    %c0_i32_0 = arith.constant 0 : i32
    %c0_i32_1 = arith.constant 0 : i32
    return %c0_i32, %c0_i32_0 : i32, i32
  }
  func.func @transform_4(%arg0: i32) -> (i32, i32) {
    %c0_i32 = arith.constant 0 : i32
    %c0_i32_0 = arith.constant 0 : i32
    %c0_i32_1 = arith.constant 0 : i32
    return %c0_i32, %c0_i32_0 : i32, i32
  }
  func.func @transform_5(%arg0: i32) -> (i32, i32) {
    %c0_i32 = arith.constant 0 : i32
    %c0_i32_0 = arith.constant 0 : i32
    %c0_i32_1 = arith.constant 0 : i32
    return %c0_i32, %c0_i32_0 : i32, i32
  }
  func.func @transform_6(%arg0: i32) -> (i32, i32) {
    %c0_i32 = arith.constant 0 : i32
    %c0_i32_0 = arith.constant 0 : i32
    %c0_i32_1 = arith.constant 0 : i32
    return %c0_i32, %c0_i32_0 : i32, i32
  }
  func.func @transform_7(%arg0: i32) -> (i32, i32) {
    %c0_i32 = arith.constant 0 : i32
    %c0_i32_0 = arith.constant 0 : i32
    return %arg0, %c0_i32 : i32, i32
  }
}

</mosaic_0001>

<llo_original>
// kernel: tpu_custom_call.1
$region0: #{tpu_custom_call.1}
  #allocation0 [shape = 'u32[]', space=smem, size = 0x4, offset = 0x4, fixed_abs, tag = 'smem constant byte address 0x4 - core index']
  #allocation1 [shape = 'u32[144,128]{1,0:T(1,128)}', space=vmem, size = 0x12000, scoped, tag = 'internal scratch']
  %s0 = inlined_call_operand.vmem [shape: f32[8,8,78], index: 0, kind: input, shape index: {}]
  %s1 = inlined_call_operand.hbm [shape: f32[78,384], index: 1, kind: input, shape index: {}]
  %s2 = inlined_call_operand.vmem [shape: f32[1,384], index: 2, kind: input, shape index: {}]
  %s3 = inlined_call_operand.hbm [shape: f32[128,384], index: 3, kind: input, shape index: {}]
  %s4 = inlined_call_operand.vmem [shape: f32[1,128], index: 4, kind: input, shape index: {}]
  %s5 = inlined_call_operand.vmem [shape: f32[128,41], index: 5, kind: input, shape index: {}]
  %s6 = inlined_call_operand.vmem [shape: f32[1,41], index: 6, kind: input, shape index: {}]
  %s7 = inlined_call_operand.hbm [shape: f32[8,41], index: 7, kind: output, shape index: {}]
  %s8 = sld [smem:[#allocation0]]
  $region46: #{tpu_custom_call.1} parent=0
    _
  %s10 = ssub.s32 1, %s8
  %s11 = scalar_select 0, %s10, %s8
  $region1: #{tpu_custom_call.1} parent=0
    #allocation2 [shape = 'u8[122880]{0}', space=vmem, size = 0x1e000, scoped, tag = 'input window, operand 1, single buffered']
    #allocation3 [shape = 's32[1]{0}', space=sflag, size = 0x4, scoped, tag = 'scoped memory for tpu_custom_call.1']
    #allocation4 [shape = 's32[1]{0}', space=sflag, size = 0x4, scoped, tag = 'scoped memory for tpu_custom_call.1']
    #allocation5 [shape = 'u8[196608]{0}', space=vmem, size = 0x30000, scoped, tag = 'input window, operand 3, single buffered']
    #allocation6 [shape = 's32[1]{0}', space=sflag, size = 0x4, scoped, tag = 'scoped memory for tpu_custom_call.1']
    #allocation7 [shape = 'u8[4096]{0}', space=vmem, size = 0x1000, scoped, tag = 'output window, operand 0, single buffered']
    %12 = vsyncpa [#allocation3], 0
    %13 = vsyncpa [#allocation6], 0
    %14 = vsyncpa [#allocation4], 0
    // Predicated region
    $region2: #{tpu_custom_call.1} parent=1 // pred_check
      _
    $region3: #{tpu_custom_call.1} parent=1 // pred_check_branch
      %16 = sbr.rel (0) target = $region5
    $region4: #{tpu_custom_call.1} parent=1 // pred_region
      _
    $region5: #{tpu_custom_call.1} parent=1 // pred_fallthru
      _
    // Predicated region
    $region6: #{tpu_custom_call.1} parent=1 // pred_check
      _
    $region7: #{tpu_custom_call.1} parent=1 // pred_check_branch
      %18 = sbr.rel (0) target = $region9
    $region8: #{tpu_custom_call.1} parent=1 // pred_region
      %s20 = ssub.s32 3840, 3840
      %21 = vsyncadd [#allocation3], %s20
      %s22 = sshll.u32 [#allocation2], 4
      %s23 = int_to_ptr.vmem [resolvable:$true] %s22
      %28 = dma.hbm_to_vmem [thread:$0]  %s1, 3840, %s23, [#allocation3], 384, 384, 24
    $region9: #{tpu_custom_call.1} parent=1 // pred_fallthru
      _
    // Predicated region
    $region10: #{tpu_custom_call.1} parent=1 // pred_check
      _
    $region11: #{tpu_custom_call.1} parent=1 // pred_check_branch
      %30 = sbr.rel (0) target = $region13
    $region12: #{tpu_custom_call.1} parent=1 // pred_region
      _
    $region13: #{tpu_custom_call.1} parent=1 // pred_fallthru
      _
    // Predicated region
    $region14: #{tpu_custom_call.1} parent=1 // pred_check
      _
    $region15: #{tpu_custom_call.1} parent=1 // pred_check_branch
      %32 = sbr.rel (0) target = $region17
    $region16: #{tpu_custom_call.1} parent=1 // pred_region
      %s34 = ssub.s32 6144, 6144
      %35 = vsyncadd [#allocation6], %s34
      %s36 = sshll.u32 [#allocation5], 4
      %s37 = int_to_ptr.vmem [resolvable:$true] %s36
      %42 = dma.hbm_to_vmem [thread:$0]  %s3, 6144, %s37, [#allocation6], 384, 384, 24
    $region17: #{tpu_custom_call.1} parent=1 // pred_fallthru
      _
    // Predicated region
    $region18: #{tpu_custom_call.1} parent=1 // pred_check
      _
    $region19: #{tpu_custom_call.1} parent=1 // pred_check_branch
      %44 = sbr.rel (0) target = $region21
    $region20: #{tpu_custom_call.1} parent=1 // pred_region
      _
    $region21: #{tpu_custom_call.1} parent=1 // pred_fallthru
      _
    // Predicated region
    $region22: #{tpu_custom_call.1} parent=1 // pred_check
      _
    $region23: #{tpu_custom_call.1} parent=1 // pred_check_branch
      %46 = sbr.rel (0) target = $region25
    $region24: #{tpu_custom_call.1} parent=1 // pred_region
      _
    $region25: #{tpu_custom_call.1} parent=1 // pred_fallthru
      _
    // Predicated region
    $region26: #{tpu_custom_call.1} parent=1 // pred_check
      _
    $region27: #{tpu_custom_call.1} parent=1 // pred_check_branch
      %48 = sbr.rel (0) target = $region29
    $region28: #{tpu_custom_call.1} parent=1 // pred_region
      _
    $region29: #{tpu_custom_call.1} parent=1 // pred_fallthru
      _
    // Predicated region
    $region30: #{tpu_custom_call.1} parent=1 // pred_check
      _
    $region31: #{tpu_custom_call.1} parent=1 // pred_check_branch
      %50 = sbr.rel (0) target = $region33
    $region32: #{tpu_custom_call.1} parent=1 // pred_region
      %51 = dma.done [#allocation3], 3840
    $region33: #{tpu_custom_call.1} parent=1 // pred_fallthru
      _
    // Predicated region
    $region34: #{tpu_custom_call.1} parent=1 // pred_check
      _
    $region35: #{tpu_custom_call.1} parent=1 // pred_check_branch
      %53 = sbr.rel (0) target = $region37
    $region36: #{tpu_custom_call.1} parent=1 // pred_region
      %54 = dma.done [#allocation6], 6144
    $region37: #{tpu_custom_call.1} parent=1 // pred_fallthru
      _
    %v55 = vld [vmem:[%s0] sm:$0xff]
    %v56 = vld [vmem:[%s0 + $0x8] sm:$0xff]
    %v57 = vld [vmem:[%s0 + $0x10] sm:$0xff]
    %v58 = vld [vmem:[%s0 + $0x18] sm:$0xff]
    %v59 = vld [vmem:[%s0 + $0x20] sm:$0xff]
    %v60 = vld [vmem:[%s0 + $0x28] sm:$0xff]
    %v61 = vld [vmem:[%s0 + $0x30] sm:$0xff]
    %v62 = vld [vmem:[%s0 + $0x38] sm:$0xff]
    %v63 = vld [vmem:[#allocation2] sm:$0xff]
    %v64 = vld [vmem:[#allocation2 + $0x8] sm:$0xff]
    %v65 = vld [vmem:[#allocation2 + $0x10] sm:$0xff]
    %v66 = vld [vmem:[#allocation2 + $0x18] sm:$0xff]
    %v67 = vld [vmem:[#allocation2 + $0x20] sm:$0xff]
    %v68 = vld [vmem:[#allocation2 + $0x28] sm:$0xff]
    %v69 = vld [vmem:[#allocation2 + $0x30] sm:$0xff]
    %v70 = vld [vmem:[#allocation2 + $0x38] sm:$0xff]
    %v71 = vld [vmem:[#allocation2 + $0x40] sm:$0xff]
    %v72 = vld [vmem:[#allocation2 + $0x48] sm:$0xff]
    %v73 = vld [vmem:[#allocation2 + $0x50] sm:$0xff]
    %v74 = vld [vmem:[#allocation2 + $0x58] sm:$0xff]
    %v75 = vld [vmem:[#allocation2 + $0x60] sm:$0xff]
    %v76 = vld [vmem:[#allocation2 + $0x68] sm:$0xff]
    %v77 = vld [vmem:[#allocation2 + $0x70] sm:$0xff]
    %v78 = vld [vmem:[#allocation2 + $0x78] sm:$0xff]
    %v79 = vld [vmem:[#allocation2 + $0x80] sm:$0xff]
    %v80 = vld [vmem:[#allocation2 + $0x88] sm:$0xff]
    %v81 = vld [vmem:[#allocation2 + $0x90] sm:$0xff]
    %v82 = vld [vmem:[#allocation2 + $0x98] sm:$0xff]
    %v83 = vld [vmem:[#allocation2 + $0xa0] sm:$0xff]
    %v84 = vld [vmem:[#allocation2 + $0xa8] sm:$0xff]
    %v85 = vld [vmem:[#allocation2 + $0xb0] sm:$0xff]
    %v86 = vld [vmem:[#allocation2 + $0xb8] sm:$0xff]
    %v87 = vld [vmem:[#allocation2 + $0xc0] sm:$0xff]
    %v88 = vld [vmem:[#allocation2 + $0xc8] sm:$0xff]
    %v89 = vld [vmem:[#allocation2 + $0xd0] sm:$0xff]
    %v90 = vld [vmem:[#allocation2 + $0xd8] sm:$0x3f]
    %v91 = vld [vmem:[#allocation2 + $0xe0] sm:$0x3f]
    %v92 = vld [vmem:[#allocation2 + $0xe8] sm:$0x3f]
    %v93 = vld [vmem:[%s2] sm:$0x7]
    %v95 = vlaneseq
    %v96 = vshrl.u32 %v95, 7
    %v97 = vsub.s32 0, %v96
    %v98 = vrot.slane %v93, %v97
    %v99 = vlaneseq
    %v100 = vshrl.u32 %v99, 7
    %v101 = vsub.s32 1, %v100
    %v102 = vrot.slane %v93, %v101
    %v103 = vlaneseq
    %v104 = vshrl.u32 %v103, 7
    %v105 = vsub.s32 2, %v104
    %v106 = vrot.slane %v93, %v105
    %vm110 = vcmask 637952
    %v112 = vsel %vm110, %v55, 0
    %v115 = vsel %vm110, %v56, 0
    %v118 = vsel %vm110, %v57, 0
    %v121 = vsel %vm110, %v58, 0
    %v124 = vsel %vm110, %v59, 0
    %v127 = vsel %vm110, %v60, 0
    %v130 = vsel %vm110, %v61, 0
    %v133 = vsel %vm110, %v62, 0
    %vm135 = vcmask 1045504
    %v137 = vsel %vm135, %v90, 0
    %v140 = vsel %vm135, %v91, 0
    %v143 = vsel %vm135, %v92, 0
    %145 = vmatprep.subr.mxu0 %v64
    %146 = vmatpush1.msra.mxu0 %v63
    %147 = vmatprep.subr.mxu0 %v67
    %148 = vmatpush1.msra.mxu0 %v66
    %149 = vmatprep.subr.mxu0 %v70
    %150 = vmatpush1.msra.mxu0 %v69
    %151 = vmatprep.subr.mxu0 %v73
    %152 = vmatpush1.msra.mxu0 %v72
    %153 = vmatprep.subr.mxu0 %v76
    %154 = vmatpush1.msra.mxu0 %v75
    %155 = vmatprep.subr.mxu0 %v79
    %156 = vmatpush1.msra.mxu0 %v78
    %157 = vmatprep.subr.mxu0 %v82
    %158 = vmatpush1.msra.mxu0 %v81
    %159 = vmatprep.subr.mxu0 %v85
    %160 = vmatpush1.msra.mxu0 %v84
    %161 = vmatprep.subr.mxu0 %v88
    %162 = vmatpush1.msra.mxu0 %v87
    %163 = vmatprep.subr.mxu0 %v140
    %164 = vmatpush1.msra.mxu0 %v137
    %165 = vmatprep.subr.mxu0 0.0
    %166 = vmatpush1.msra.mxu0 0.0
    %167 = vmatprep.subr.mxu0 0.0
    %168 = vmatpush1.msra.mxu0 0.0
    %169 = vmatprep.subr.mxu0 0.0
    %170 = vmatpush1.msra.mxu0 0.0
    %171 = vmatprep.subr.mxu0 0.0
    %172 = vmatpush1.msra.mxu0 0.0
    %173 = vmatprep.subr.mxu0 0.0
    %174 = vmatpush1.msra.mxu0 0.0
    %175 = vmatprep.subr.mxu0 0.0
    %176 = vmatpush1.msra.mxu0 0.0
    %177 = vmatprep.subr.mxu0 0.0
    %178 = vmatpush1.msra.mxu0 0.0
    %179 = vmatprep.subr.mxu0 0.0
    %180 = vmatpush1.msra.mxu0 0.0
    %181 = vmatprep.subr.mxu0 0.0
    %182 = vmatpush1.msra.mxu0 0.0
    %183 = vmatprep.subr.mxu0 0.0
    %184 = vmatpush1.msra.mxu0 0.0
    %185 = vmatprep.subr.mxu0 0.0
    %186 = vmatpush1.msra.mxu0 0.0
    %187 = vmatprep.subr.mxu0 0.0
    %188 = vmatpush1.msra.mxu0 0.0
    %189 = vmatprep.subr.mxu0 0.0
    %190 = vmatpush1.msra.mxu0 0.0
    %191 = vmatprep.subr.mxu0 0.0
    %192 = vmatpush1.msra.mxu0 0.0
    %193 = vmatprep.subr.mxu0 0.0
    %194 = vmatpush1.msra.mxu0 0.0
    %195 = vmatprep.subr.mxu0 0.0
    %196 = vmatpush1.msra.mxu0 0.0
    %197 = vmatprep.subr.mxu0 0.0
    %198 = vmatpush1.msra.mxu0 0.0
    %199 = vmatprep.subr.mxu0 0.0
    %200 = vmatpush1.msra.mxu0 0.0
    %201 = vmatprep.subr.mxu0 0.0
    %202 = vmatpush1.msra.mxu0 0.0
    %203 = vmatprep.subr.mxu0 0.0
    %204 = vmatpush1.msra.mxu0 0.0
    %205 = vmatprep.subr.mxu0 0.0
    %206 = vmatpush1.msra.mxu0 0.0
    %207 = vmatprep.subr.mxu0 0.0
    %208 = vmatpush1.msra.mxu0 0.0
    %209 = vmatprep.mubr.f32.mxu0 0.0
    %210 = vmatmul.mubr.f32.gmra.mrb[0].mxu0 %v112
    %v211 = vpop.f32.mrb[0].mxu0
    %v212 = vadd.f32 %v98, %v211
    %v213 = vpop.f32.mrb[0].mxu0
    %v214 = vadd.f32 %v102, %v213
    %215 = vmatprep.mubr.f32.mxu0 0.0
    %216 = vmatmul.mubr.f32.gmra.mrb[0].mxu0 %v115
    %v217 = vpop.f32.mrb[0].mxu0
    %v218 = vadd.f32 %v98, %v217
    %v219 = vpop.f32.mrb[0].mxu0
    %v220 = vadd.f32 %v102, %v219
    %221 = vmatprep.mubr.f32.mxu0 0.0
    %222 = vmatmul.mubr.f32.gmra.mrb[0].mxu0 %v118
    %v223 = vpop.f32.mrb[0].mxu0
    %v224 = vadd.f32 %v98, %v223
    %v225 = vpop.f32.mrb[0].mxu0
    %v226 = vadd.f32 %v102, %v225
    %227 = vmatprep.mubr.f32.mxu0 0.0
    %228 = vmatmul.mubr.f32.gmra.mrb[0].mxu0 %v121
    %v229 = vpop.f32.mrb[0].mxu0
    %v230 = vadd.f32 %v98, %v229
    %v231 = vpop.f32.mrb[0].mxu0
    %v232 = vadd.f32 %v102, %v231
    %233 = vmatprep.mubr.f32.mxu0 0.0
    %234 = vmatmul.mubr.f32.gmra.mrb[0].mxu0 %v124
    %v235 = vpop.f32.mrb[0].mxu0
    %v236 = vadd.f32 %v98, %v235
    %v237 = vpop.f32.mrb[0].mxu0
    %v238 = vadd.f32 %v102, %v237
    %239 = vmatprep.mubr.f32.mxu0 0.0
    %240 = vmatmul.mubr.f32.gmra.mrb[0].mxu0 %v127
    %v241 = vpop.f32.mrb[0].mxu0
    %v242 = vadd.f32 %v98, %v241
    %v243 = vpop.f32.mrb[0].mxu0
    %v244 = vadd.f32 %v102, %v243
    %245 = vmatprep.mubr.f32.mxu0 0.0
    %246 = vmatmul.mubr.f32.gmra.mrb[0].mxu0 %v130
    %v247 = vpop.f32.mrb[0].mxu0
    %v248 = vadd.f32 %v98, %v247
    %v249 = vpop.f32.mrb[0].mxu0
    %v250 = vadd.f32 %v102, %v249
    %251 = vmatprep.mubr.f32.mxu0 0.0
    %252 = vmatmul.mubr.f32.gmra.mrb[0].mxu0 %v133
    %v253 = vpop.f32.mrb[0].mxu0
    %v254 = vadd.f32 %v98, %v253
    %v255 = vpop.f32.mrb[0].mxu0
    %v256 = vadd.f32 %v102, %v255
    %257 = vdwg.mxu0
    %258 = vmatprep.subr.mxu0 0.0
    %259 = vmatpush1.msra.mxu0 %v65
    %260 = vmatprep.subr.mxu0 0.0
    %261 = vmatpush1.msra.mxu0 %v68
    %262 = vmatprep.subr.mxu0 0.0
    %263 = vmatpush1.msra.mxu0 %v71
    %264 = vmatprep.subr.mxu0 0.0
    %265 = vmatpush1.msra.mxu0 %v74
    %266 = vmatprep.subr.mxu0 0.0
    %267 = vmatpush1.msra.mxu0 %v77
    %268 = vmatprep.subr.mxu0 0.0
    %269 = vmatpush1.msra.mxu0 %v80
    %270 = vmatprep.subr.mxu0 0.0
    %271 = vmatpush1.msra.mxu0 %v83
    %272 = vmatprep.subr.mxu0 0.0
    %273 = vmatpush1.msra.mxu0 %v86
    %274 = vmatprep.subr.mxu0 0.0
    %275 = vmatpush1.msra.mxu0 %v89
    %276 = vmatprep.subr.mxu0 0.0
    %277 = vmatpush1.msra.mxu0 %v143
    %278 = vmatprep.subr.mxu0 0.0
    %279 = vmatpush1.msra.mxu0 0.0
    %280 = vmatprep.subr.mxu0 0.0
    %281 = vmatpush1.msra.mxu0 0.0
    %282 = vmatprep.subr.mxu0 0.0
    %283 = vmatpush1.msra.mxu0 0.0
    %284 = vmatprep.subr.mxu0 0.0
    %285 = vmatpush1.msra.mxu0 0.0
    %286 = vmatprep.subr.mxu0 0.0
    %287 = vmatpush1.msra.mxu0 0.0
    %288 = vmatprep.subr.mxu0 0.0
    %289 = vmatpush1.msra.mxu0 0.0
    %290 = vmatprep.subr.mxu0 0.0
    %291 = vmatpush1.msra.mxu0 0.0
    %292 = vmatprep.subr.mxu0 0.0
    %293 = vmatpush1.msra.mxu0 0.0
    %294 = vmatprep.subr.mxu0 0.0
    %295 = vmatpush1.msra.mxu0 0.0
    %296 = vmatprep.subr.mxu0 0.0
    %297 = vmatpush1.msra.mxu0 0.0
    %298 = vmatprep.subr.mxu0 0.0
    %299 = vmatpush1.msra.mxu0 0.0
    %300 = vmatprep.subr.mxu0 0.0
    %301 = vmatpush1.msra.mxu0 0.0
    %302 = vmatprep.subr.mxu0 0.0
    %303 = vmatpush1.msra.mxu0 0.0
    %304 = vmatprep.subr.mxu0 0.0
    %305 = vmatpush1.msra.mxu0 0.0
    %306 = vmatprep.subr.mxu0 0.0
    %307 = vmatpush1.msra.mxu0 0.0
    %308 = vmatprep.subr.mxu0 0.0
    %309 = vmatpush1.msra.mxu0 0.0
    %310 = vmatprep.subr.mxu0 0.0
    %311 = vmatpush1.msra.mxu0 0.0
    %312 = vmatprep.subr.mxu0 0.0
    %313 = vmatpush1.msra.mxu0 0.0
    %314 = vmatprep.subr.mxu0 0.0
    %315 = vmatpush1.msra.mxu0 0.0
    %316 = vmatprep.subr.mxu0 0.0
    %317 = vmatpush1.msra.mxu0 0.0
    %318 = vmatprep.subr.mxu0 0.0
    %319 = vmatpush1.msra.mxu0 0.0
    %320 = vmatprep.subr.mxu0 0.0
    %321 = vmatpush1.msra.mxu0 0.0
    %322 = vmatprep.mubr.f32.mxu0 0.0
    %323 = vmatmul.mubr.f32.gmra.mrb[0].mxu0 %v112
    %v324 = vpop.f32.mrb[0].mxu0
    %v325 = vadd.f32 %v106, %v324
    %v326 = vpop.f32.mrb[0].mxu0
    %327 = vmatprep.mubr.f32.mxu0 0.0
    %328 = vmatmul.mubr.f32.gmra.mrb[0].mxu0 %v115
    %v329 = vpop.f32.mrb[0].mxu0
    %v330 = vadd.f32 %v106, %v329
    %v331 = vpop.f32.mrb[0].mxu0
    %332 = vmatprep.mubr.f32.mxu0 0.0
    %333 = vmatmul.mubr.f32.gmra.mrb[0].mxu0 %v118
    %v334 = vpop.f32.mrb[0].mxu0
    %v335 = vadd.f32 %v106, %v334
    %v336 = vpop.f32.mrb[0].mxu0
    %337 = vmatprep.mubr.f32.mxu0 0.0
    %338 = vmatmul.mubr.f32.gmra.mrb[0].mxu0 %v121
    %v339 = vpop.f32.mrb[0].mxu0
    %v340 = vadd.f32 %v106, %v339
    %v341 = vpop.f32.mrb[0].mxu0
    %342 = vmatprep.mubr.f32.mxu0 0.0
    %343 = vmatmul.mubr.f32.gmra.mrb[0].mxu0 %v124
    %v344 = vpop.f32.mrb[0].mxu0
    %v345 = vadd.f32 %v106, %v344
    %v346 = vpop.f32.mrb[0].mxu0
    %347 = vmatprep.mubr.f32.mxu0 0.0
    %348 = vmatmul.mubr.f32.gmra.mrb[0].mxu0 %v127
    %v349 = vpop.f32.mrb[0].mxu0
    %v350 = vadd.f32 %v106, %v349
    %v351 = vpop.f32.mrb[0].mxu0
    %352 = vmatprep.mubr.f32.mxu0 0.0
    %353 = vmatmul.mubr.f32.gmra.mrb[0].mxu0 %v130
    %v354 = vpop.f32.mrb[0].mxu0
    %v355 = vadd.f32 %v106, %v354
    %v356 = vpop.f32.mrb[0].mxu0
    %357 = vmatprep.mubr.f32.mxu0 0.0
    %358 = vmatmul.mubr.f32.gmra.mrb[0].mxu0 %v133
    %v359 = vpop.f32.mrb[0].mxu0
    %v360 = vadd.f32 %v106, %v359
    %v361 = vpop.f32.mrb[0].mxu0
    %362 = vdwg.mxu0
    %v363 = vld [vmem:[#allocation5] sm:$0xff]
    %v364 = vld [vmem:[#allocation5 + $0x8] sm:$0xff]
    %v365 = vld [vmem:[#allocation5 + $0x10] sm:$0xff]
    %v366 = vld [vmem:[#allocation5 + $0x18] sm:$0xff]
    %v367 = vld [vmem:[#allocation5 + $0x20] sm:$0xff]
    %v368 = vld [vmem:[#allocation5 + $0x28] sm:$0xff]
    %v369 = vld [vmem:[#allocation5 + $0x30] sm:$0xff]
    %v370 = vld [vmem:[#allocation5 + $0x38] sm:$0xff]
    %v371 = vld [vmem:[#allocation5 + $0x40] sm:$0xff]
    %v372 = vld [vmem:[#allocation5 + $0x48] sm:$0xff]
    %v373 = vld [vmem:[#allocation5 + $0x50] sm:$0xff]
    %v374 = vld [vmem:[#allocation5 + $0x58] sm:$0xff]
    %v375 = vld [vmem:[#allocation5 + $0x60] sm:$0xff]
    %v376 = vld [vmem:[#allocation5 + $0x68] sm:$0xff]
    %v377 = vld [vmem:[#allocation5 + $0x70] sm:$0xff]
    %v378 = vld [vmem:[#allocation5 + $0x78] sm:$0xff]
    %v379 = vld [vmem:[#allocation5 + $0x80] sm:$0xff]
    %v380 = vld [vmem:[#allocation5 + $0x88] sm:$0xff]
    %v381 = vld [vmem:[#allocation5 + $0x90] sm:$0xff]
    %v382 = vld [vmem:[#allocation5 + $0x98] sm:$0xff]
    %v383 = vld [vmem:[#allocation5 + $0xa0] sm:$0xff]
    %v384 = vld [vmem:[#allocation5 + $0xa8] sm:$0xff]
    %v385 = vld [vmem:[#allocation5 + $0xb0] sm:$0xff]
    %v386 = vld [vmem:[#allocation5 + $0xb8] sm:$0xff]
    %v387 = vld [vmem:[#allocation5 + $0xc0] sm:$0xff]
    %v388 = vld [vmem:[#allocation5 + $0xc8] sm:$0xff]
    %v389 = vld [vmem:[#allocation5 + $0xd0] sm:$0xff]
    %v390 = vld [vmem:[#allocation5 + $0xd8] sm:$0xff]
    %v391 = vld [vmem:[#allocation5 + $0xe0] sm:$0xff]
    %v392 = vld [vmem:[#allocation5 + $0xe8] sm:$0xff]
    %v393 = vld [vmem:[#allocation5 + $0xf0] sm:$0xff]
    %v394 = vld [vmem:[#allocation5 + $0xf8] sm:$0xff]
    %v395 = vld [vmem:[#allocation5 + $0x100] sm:$0xff]
    %v396 = vld [vmem:[#allocation5 + $0x108] sm:$0xff]
    %v397 = vld [vmem:[#allocation5 + $0x110] sm:$0xff]
    %v398 = vld [vmem:[#allocation5 + $0x118] sm:$0xff]
    %v399 = vld [vmem:[#allocation5 + $0x120] sm:$0xff]
    %v400 = vld [vmem:[#allocation5 + $0x128] sm:$0xff]
    %v401 = vld [vmem:[#allocation5 + $0x130] sm:$0xff]
    %v402 = vld [vmem:[#allocation5 + $0x138] sm:$0xff]
    %v403 = vld [vmem:[#allocation5 + $0x140] sm:$0xff]
    %v404 = vld [vmem:[#allocation5 + $0x148] sm:$0xff]
    %v405 = vld [vmem:[#allocation5 + $0x150] sm:$0xff]
    %v406 = vld [vmem:[#allocation5 + $0x158] sm:$0xff]
    %v407 = vld [vmem:[#allocation5 + $0x160] sm:$0xff]
    %v408 = vld [vmem:[#allocation5 + $0x168] sm:$0xff]
    %v409 = vld [vmem:[#allocation5 + $0x170] sm:$0xff]
    %v410 = vld [vmem:[#allocation5 + $0x178] sm:$0xff]
    %v411 = vld [vmem:[%s4] sm:$0x1]
    %v413 = vlaneseq
    %v414 = vshrl.u32 %v413, 7
    %v415 = vsub.s32 0, %v414
    %v416 = vrot.slane %v411, %v415
    %418 = vmatprep.subr.mxu0 %v364
    %419 = vmatpush1.msra.mxu0 %v363
    %420 = vmatprep.subr.mxu0 %v367
    %421 = vmatpush1.msra.mxu0 %v366
    %422 = vmatprep.subr.mxu0 %v370
    %423 = vmatpush1.msra.mxu0 %v369
    %424 = vmatprep.subr.mxu0 %v373
    %425 = vmatpush1.msra.mxu0 %v372
    %426 = vmatprep.subr.mxu0 %v376
    %427 = vmatpush1.msra.mxu0 %v375
    %428 = vmatprep.subr.mxu0 %v379
    %429 = vmatpush1.msra.mxu0 %v378
    %430 = vmatprep.subr.mxu0 %v382
    %431 = vmatpush1.msra.mxu0 %v381
    %432 = vmatprep.subr.mxu0 %v385
    %433 = vmatpush1.msra.mxu0 %v384
    %434 = vmatprep.subr.mxu0 %v388
    %435 = vmatpush1.msra.mxu0 %v387
    %436 = vmatprep.subr.mxu0 %v391
    %437 = vmatpush1.msra.mxu0 %v390
    %438 = vmatprep.subr.mxu0 %v394
    %439 = vmatpush1.msra.mxu0 %v393
    %440 = vmatprep.subr.mxu0 %v397
    %441 = vmatpush1.msra.mxu0 %v396
    %442 = vmatprep.subr.mxu0 %v400
    %443 = vmatpush1.msra.mxu0 %v399
    %444 = vmatprep.subr.mxu0 %v403
    %445 = vmatpush1.msra.mxu0 %v402
    %446 = vmatprep.subr.mxu0 %v406
    %447 = vmatpush1.msra.mxu0 %v405
    %448 = vmatprep.subr.mxu0 %v409
    %449 = vmatpush1.msra.mxu0 %v408
    %450 = vmatprep.subr.mxu0 0.0
    %451 = vmatpush1.msra.mxu0 0.0
    %452 = vmatprep.subr.mxu0 0.0
    %453 = vmatpush1.msra.mxu0 0.0
    %454 = vmatprep.subr.mxu0 0.0
    %455 = vmatpush1.msra.mxu0 0.0
    %456 = vmatprep.subr.mxu0 0.0
    %457 = vmatpush1.msra.mxu0 0.0
    %458 = vmatprep.subr.mxu0 0.0
    %459 = vmatpush1.msra.mxu0 0.0
    %460 = vmatprep.subr.mxu0 0.0
    %461 = vmatpush1.msra.mxu0 0.0
    %462 = vmatprep.subr.mxu0 0.0
    %463 = vmatpush1.msra.mxu0 0.0
    %464 = vmatprep.subr.mxu0 0.0
    %465 = vmatpush1.msra.mxu0 0.0
    %466 = vmatprep.subr.mxu0 0.0
    %467 = vmatpush1.msra.mxu0 0.0
    %468 = vmatprep.subr.mxu0 0.0
    %469 = vmatpush1.msra.mxu0 0.0
    %470 = vmatprep.subr.mxu0 0.0
    %471 = vmatpush1.msra.mxu0 0.0
    %472 = vmatprep.subr.mxu0 0.0
    %473 = vmatpush1.msra.mxu0 0.0
    %474 = vmatprep.subr.mxu0 0.0
    %475 = vmatpush1.msra.mxu0 0.0
    %476 = vmatprep.subr.mxu0 0.0
    %477 = vmatpush1.msra.mxu0 0.0
    %478 = vmatprep.subr.mxu0 0.0
    %479 = vmatpush1.msra.mxu0 0.0
    %480 = vmatprep.subr.mxu0 0.0
    %481 = vmatpush1.msra.mxu0 0.0
    %482 = vmatprep.mubr.f32.mxu0 0.0
    %483 = vmatmul.mubr.f32.gmra.mrb[0].mxu0 0.0
    %v484 = vpop.f32.mrb[0].mxu0
    %v485 = vadd.f32 0.0, %v484
    %v486 = vpop.f32.mrb[0].mxu0
    %v487 = vadd.f32 0.0, %v486
    %488 = vdwg.mxu0
    %489 = vmatprep.subr.mxu0 0.0
    %490 = vmatpush1.msra.mxu0 %v365
    %491 = vmatprep.subr.mxu0 0.0
    %492 = vmatpush1.msra.mxu0 %v368
    %493 = vmatprep.subr.mxu0 0.0
    %494 = vmatpush1.msra.mxu0 %v371
    %495 = vmatprep.subr.mxu0 0.0
    %496 = vmatpush1.msra.mxu0 %v374
    %497 = vmatprep.subr.mxu0 0.0
    %498 = vmatpush1.msra.mxu0 %v377
    %499 = vmatprep.subr.mxu0 0.0
    %500 = vmatpush1.msra.mxu0 %v380
    %501 = vmatprep.subr.mxu0 0.0
    %502 = vmatpush1.msra.mxu0 %v383
    %503 = vmatprep.subr.mxu0 0.0
    %504 = vmatpush1.msra.mxu0 %v386
    %505 = vmatprep.subr.mxu0 0.0
    %506 = vmatpush1.msra.mxu0 %v389
    %507 = vmatprep.subr.mxu0 0.0
    %508 = vmatpush1.msra.mxu0 %v392
    %509 = vmatprep.subr.mxu0 0.0
    %510 = vmatpush1.msra.mxu0 %v395
    %511 = vmatprep.subr.mxu0 0.0
    %512 = vmatpush1.msra.mxu0 %v398
    %513 = vmatprep.subr.mxu0 0.0
    %514 = vmatpush1.msra.mxu0 %v401
    %515 = vmatprep.subr.mxu0 0.0
    %516 = vmatpush1.msra.mxu0 %v404
    %517 = vmatprep.subr.mxu0 0.0
    %518 = vmatpush1.msra.mxu0 %v407
    %519 = vmatprep.subr.mxu0 0.0
    %520 = vmatpush1.msra.mxu0 %v410
    %521 = vmatprep.subr.mxu0 0.0
    %522 = vmatpush1.msra.mxu0 0.0
    %523 = vmatprep.subr.mxu0 0.0
    %524 = vmatpush1.msra.mxu0 0.0
    %525 = vmatprep.subr.mxu0 0.0
    %526 = vmatpush1.msra.mxu0 0.0
    %527 = vmatprep.subr.mxu0 0.0
    %528 = vmatpush1.msra.mxu0 0.0
    %529 = vmatprep.subr.mxu0 0.0
    %530 = vmatpush1.msra.mxu0 0.0
    %531 = vmatprep.subr.mxu0 0.0
    %532 = vmatpush1.msra.mxu0 0.0
    %533 = vmatprep.subr.mxu0 0.0
    %534 = vmatpush1.msra.mxu0 0.0
    %535 = vmatprep.subr.mxu0 0.0
    %536 = vmatpush1.msra.mxu0 0.0
    %537 = vmatprep.subr.mxu0 0.0
    %538 = vmatpush1.msra.mxu0 0.0
    %539 = vmatprep.subr.mxu0 0.0
    %540 = vmatpush1.msra.mxu0 0.0
    %541 = vmatprep.subr.mxu0 0.0
    %542 = vmatpush1.msra.mxu0 0.0
    %543 = vmatprep.subr.mxu0 0.0
    %544 = vmatpush1.msra.mxu0 0.0
    %545 = vmatprep.subr.mxu0 0.0
    %546 = vmatpush1.msra.mxu0 0.0
    %547 = vmatprep.subr.mxu0 0.0
    %548 = vmatpush1.msra.mxu0 0.0
    %549 = vmatprep.subr.mxu0 0.0
    %550 = vmatpush1.msra.mxu0 0.0
    %551 = vmatprep.subr.mxu0 0.0
    %552 = vmatpush1.msra.mxu0 0.0
    %553 = vmatprep.mubr.f32.mxu0 0.0
    %554 = vmatmul.mubr.f32.gmra.mrb[0].mxu0 0.0
    %v555 = vpop.f32.mrb[0].mxu0
    %v556 = vadd.f32 0.0, %v555
    %v557 = vpop.f32.mrb[0].mxu0
    %558 = vdwg.mxu0
    %v559 = vadd.f32 %v212, %v485
    %v560 = vxor.u32 %v559, 2147483648
    %v561 = vmul.f32 %v560, 1.442695
    %v562 = vpow.pop %v561
    %v563 = vadd.f32 %v562, 1.0
    %v564 = vrcp.pop %v563
    %v565 = vmul.f32 1.0, %v564
    %v566 = vadd.f32 %v214, %v487
    %v567 = vxor.u32 %v566, 2147483648
    %v568 = vmul.f32 %v567, 1.442695
    %v569 = vpow.pop %v568
    %v570 = vadd.f32 %v569, 1.0
    %v571 = vrcp.pop %v570
    %v572 = vmul.f32 1.0, %v571
    %v573 = vadd.f32 %v556, %v416
    %v574 = vmul.f32 %v565, %v573
    %v575 = vadd.f32 %v325, %v574
    %v576 = vtanh.pop %v575
    %v577 = vsub.f32 1.0, %v572
    %v578 = vmul.f32 %v577, %v576
    %v579 = vmul.f32 %v572, 0.0
    %v580 = vadd.f32 %v578, %v579
    %581 = vmatprep.subr.mxu0 %v364
    %582 = vmatpush1.msra.mxu0 %v363
    %583 = vmatprep.subr.mxu0 %v367
    %584 = vmatpush1.msra.mxu0 %v366
    %585 = vmatprep.subr.mxu0 %v370
    %586 = vmatpush1.msra.mxu0 %v369
    %587 = vmatprep.subr.mxu0 %v373
    %588 = vmatpush1.msra.mxu0 %v372
    %589 = vmatprep.subr.mxu0 %v376
    %590 = vmatpush1.msra.mxu0 %v375
    %591 = vmatprep.subr.mxu0 %v379
    %592 = vmatpush1.msra.mxu0 %v378
    %593 = vmatprep.subr.mxu0 %v382
    %594 = vmatpush1.msra.mxu0 %v381
    %595 = vmatprep.subr.mxu0 %v385
    %596 = vmatpush1.msra.mxu0 %v384
    %597 = vmatprep.subr.mxu0 %v388
    %598 = vmatpush1.msra.mxu0 %v387
    %599 = vmatprep.subr.mxu0 %v391
    %600 = vmatpush1.msra.mxu0 %v390
    %601 = vmatprep.subr.mxu0 %v394
    %602 = vmatpush1.msra.mxu0 %v393
    %603 = vmatprep.subr.mxu0 %v397
    %604 = vmatpush1.msra.mxu0 %v396
    %605 = vmatprep.subr.mxu0 %v400
    %606 = vmatpush1.msra.mxu0 %v399
    %607 = vmatprep.subr.mxu0 %v403
    %608 = vmatpush1.msra.mxu0 %v402
    %609 = vmatprep.subr.mxu0 %v406
    %610 = vmatpush1.msra.mxu0 %v405
    %611 = vmatprep.subr.mxu0 %v409
    %612 = vmatpush1.msra.mxu0 %v408
    %613 = vmatprep.subr.mxu0 0.0
    %614 = vmatpush1.msra.mxu0 0.0
    %615 = vmatprep.subr.mxu0 0.0
    %616 = vmatpush1.msra.mxu0 0.0
    %617 = vmatprep.subr.mxu0 0.0
    %618 = vmatpush1.msra.mxu0 0.0
    %619 = vmatprep.subr.mxu0 0.0
    %620 = vmatpush1.msra.mxu0 0.0
    %621 = vmatprep.subr.mxu0 0.0
    %622 = vmatpush1.msra.mxu0 0.0
    %623 = vmatprep.subr.mxu0 0.0
    %624 = vmatpush1.msra.mxu0 0.0
    %625 = vmatprep.subr.mxu0 0.0
    %626 = vmatpush1.msra.mxu0 0.0
    %627 = vmatprep.subr.mxu0 0.0
    %628 = vmatpush1.msra.mxu0 0.0
    %629 = vmatprep.subr.mxu0 0.0
    %630 = vmatpush1.msra.mxu0 0.0
    %631 = vmatprep.subr.mxu0 0.0
    %632 = vmatpush1.msra.mxu0 0.0
    %633 = vmatprep.subr.mxu0 0.0
    %634 = vmatpush1.msra.mxu0 0.0
    %635 = vmatprep.subr.mxu0 0.0
    %636 = vmatpush1.msra.mxu0 0.0
    %637 = vmatprep.subr.mxu0 0.0
    %638 = vmatpush1.msra.mxu0 0.0
    %639 = vmatprep.subr.mxu0 0.0
    %640 = vmatpush1.msra.mxu0 0.0
    %641 = vmatprep.subr.mxu0 0.0
    %642 = vmatpush1.msra.mxu0 0.0
    %643 = vmatprep.subr.mxu0 0.0
    %644 = vmatpush1.msra.mxu0 0.0
    %645 = vmatprep.mubr.f32.mxu0 0.0
    %646 = vmatmul.mubr.f32.gmra.mrb[0].mxu0 %v580
    %v647 = vpop.f32.mrb[0].mxu0
    %v648 = vadd.f32 0.0, %v647
    %v649 = vpop.f32.mrb[0].mxu0
    %v650 = vadd.f32 0.0, %v649
    %651 = vdwg.mxu0
    %652 = vmatprep.subr.mxu0 0.0
    %653 = vmatpush1.msra.mxu0 %v365
    %654 = vmatprep.subr.mxu0 0.0
    %655 = vmatpush1.msra.mxu0 %v368
    %656 = vmatprep.subr.mxu0 0.0
    %657 = vmatpush1.msra.mxu0 %v371
    %658 = vmatprep.subr.mxu0 0.0
    %659 = vmatpush1.msra.mxu0 %v374
    %660 = vmatprep.subr.mxu0 0.0
    %661 = vmatpush1.msra.mxu0 %v377
    %662 = vmatprep.subr.mxu0 0.0
    %663 = vmatpush1.msra.mxu0 %v380
    %664 = vmatprep.subr.mxu0 0.0
    %665 = vmatpush1.msra.mxu0 %v383
    %666 = vmatprep.subr.mxu0 0.0
    %667 = vmatpush1.msra.mxu0 %v386
    %668 = vmatprep.subr.mxu0 0.0
    %669 = vmatpush1.msra.mxu0 %v389
    %670 = vmatprep.subr.mxu0 0.0
    %671 = vmatpush1.msra.mxu0 %v392
    %672 = vmatprep.subr.mxu0 0.0
    %673 = vmatpush1.msra.mxu0 %v395
    %674 = vmatprep.subr.mxu0 0.0
    %675 = vmatpush1.msra.mxu0 %v398
    %676 = vmatprep.subr.mxu0 0.0
    %677 = vmatpush1.msra.mxu0 %v401
    %678 = vmatprep.subr.mxu0 0.0
    %679 = vmatpush1.msra.mxu0 %v404
    %680 = vmatprep.subr.mxu0 0.0
    %681 = vmatpush1.msra.mxu0 %v407
    %682 = vmatprep.subr.mxu0 0.0
    %683 = vmatpush1.msra.mxu0 %v410
    %684 = vmatprep.subr.mxu0 0.0
    %685 = vmatpush1.msra.mxu0 0.0
    %686 = vmatprep.subr.mxu0 0.0
    %687 = vmatpush1.msra.mxu0 0.0
    %688 = vmatprep.subr.mxu0 0.0
    %689 = vmatpush1.msra.mxu0 0.0
    %690 = vmatprep.subr.mxu0 0.0
    %691 = vmatpush1.msra.mxu0 0.0
    %692 = vmatprep.subr.mxu0 0.0
    %693 = vmatpush1.msra.mxu0 0.0
    %694 = vmatprep.subr.mxu0 0.0
    %695 = vmatpush1.msra.mxu0 0.0
    %696 = vmatprep.subr.mxu0 0.0
    %697 = vmatpush1.msra.mxu0 0.0
    %698 = vmatprep.subr.mxu0 0.0
    %699 = vmatpush1.msra.mxu0 0.0
    %700 = vmatprep.subr.mxu0 0.0
    %701 = vmatpush1.msra.mxu0 0.0
    %702 = vmatprep.subr.mxu0 0.0
    %703 = vmatpush1.msra.mxu0 0.0
    %704 = vmatprep.subr.mxu0 0.0
    %705 = vmatpush1.msra.mxu0 0.0
    %706 = vmatprep.subr.mxu0 0.0
    %707 = vmatpush1.msra.mxu0 0.0
    %708 = vmatprep.subr.mxu0 0.0
    %709 = vmatpush1.msra.mxu0 0.0
    %710 = vmatprep.subr.mxu0 0.0
    %711 = vmatpush1.msra.mxu0 0.0
    %712 = vmatprep.subr.mxu0 0.0
    %713 = vmatpush1.msra.mxu0 0.0
    %714 = vmatprep.subr.mxu0 0.0
    %715 = vmatpush1.msra.mxu0 0.0
    %716 = vmatprep.mubr.f32.mxu0 0.0
    %717 = vmatmul.mubr.f32.gmra.mrb[0].mxu0 %v580
    %v718 = vpop.f32.mrb[0].mxu0
    %v719 = vadd.f32 0.0, %v718
    %v720 = vpop.f32.mrb[0].mxu0
    %721 = vdwg.mxu0
    %v722 = vadd.f32 %v218, %v648
    %v723 = vxor.u32 %v722, 2147483648
    %v724 = vmul.f32 %v723, 1.442695
    %v725 = vpow.pop %v724
    %v726 = vadd.f32 %v725, 1.0
    %v727 = vrcp.pop %v726
    %v728 = vmul.f32 1.0, %v727
    %v729 = vadd.f32 %v220, %v650
    %v730 = vxor.u32 %v729, 2147483648
    %v731 = vmul.f32 %v730, 1.442695
    %v732 = vpow.pop %v731
    %v733 = vadd.f32 %v732, 1.0
    %v734 = vrcp.pop %v733
    %v735 = vmul.f32 1.0, %v734
    %v736 = vadd.f32 %v719, %v416
    %v737 = vmul.f32 %v728, %v736
    %v738 = vadd.f32 %v330, %v737
    %v739 = vtanh.pop %v738
    %v740 = vsub.f32 1.0, %v735
    %v741 = vmul.f32 %v740, %v739
    %v742 = vmul.f32 %v735, %v580
    %v743 = vadd.f32 %v741, %v742
    %744 = vmatprep.subr.mxu0 %v364
    %745 = vmatpush1.msra.mxu0 %v363
    %746 = vmatprep.subr.mxu0 %v367
    %747 = vmatpush1.msra.mxu0 %v366
    %748 = vmatprep.subr.mxu0 %v370
    %749 = vmatpush1.msra.mxu0 %v369
    %750 = vmatprep.subr.mxu0 %v373
    %751 = vmatpush1.msra.mxu0 %v372
    %752 = vmatprep.subr.mxu0 %v376
    %753 = vmatpush1.msra.mxu0 %v375
    %754 = vmatprep.subr.mxu0 %v379
    %755 = vmatpush1.msra.mxu0 %v378
    %756 = vmatprep.subr.mxu0 %v382
    %757 = vmatpush1.msra.mxu0 %v381
    %758 = vmatprep.subr.mxu0 %v385
    %759 = vmatpush1.msra.mxu0 %v384
    %760 = vmatprep.subr.mxu0 %v388
    %761 = vmatpush1.msra.mxu0 %v387
    %762 = vmatprep.subr.mxu0 %v391
    %763 = vmatpush1.msra.mxu0 %v390
    %764 = vmatprep.subr.mxu0 %v394
    %765 = vmatpush1.msra.mxu0 %v393
    %766 = vmatprep.subr.mxu0 %v397
    %767 = vmatpush1.msra.mxu0 %v396
    %768 = vmatprep.subr.mxu0 %v400
    %769 = vmatpush1.msra.mxu0 %v399
    %770 = vmatprep.subr.mxu0 %v403
    %771 = vmatpush1.msra.mxu0 %v402
    %772 = vmatprep.subr.mxu0 %v406
    %773 = vmatpush1.msra.mxu0 %v405
    %774 = vmatprep.subr.mxu0 %v409
    %775 = vmatpush1.msra.mxu0 %v408
    %776 = vmatprep.subr.mxu0 0.0
    %777 = vmatpush1.msra.mxu0 0.0
    %778 = vmatprep.subr.mxu0 0.0
    %779 = vmatpush1.msra.mxu0 0.0
    %780 = vmatprep.subr.mxu0 0.0
    %781 = vmatpush1.msra.mxu0 0.0
    %782 = vmatprep.subr.mxu0 0.0
    %783 = vmatpush1.msra.mxu0 0.0
    %784 = vmatprep.subr.mxu0 0.0
    %785 = vmatpush1.msra.mxu0 0.0
    %786 = vmatprep.subr.mxu0 0.0
    %787 = vmatpush1.msra.mxu0 0.0
    %788 = vmatprep.subr.mxu0 0.0
    %789 = vmatpush1.msra.mxu0 0.0
    %790 = vmatprep.subr.mxu0 0.0
    %791 = vmatpush1.msra.mxu0 0.0
    %792 = vmatprep.subr.mxu0 0.0
    %793 = vmatpush1.msra.mxu0 0.0
    %794 = vmatprep.subr.mxu0 0.0
    %795 = vmatpush1.msra.mxu0 0.0
    %796 = vmatprep.subr.mxu0 0.0
    %797 = vmatpush1.msra.mxu0 0.0
    %798 = vmatprep.subr.mxu0 0.0
    %799 = vmatpush1.msra.mxu0 0.0
    %800 = vmatprep.subr.mxu0 0.0
    %801 = vmatpush1.msra.mxu0 0.0
    %802 = vmatprep.subr.mxu0 0.0
    %803 = vmatpush1.msra.mxu0 0.0
    %804 = vmatprep.subr.mxu0 0.0
    %805 = vmatpush1.msra.mxu0 0.0
    %806 = vmatprep.subr.mxu0 0.0
    %807 = vmatpush1.msra.mxu0 0.0
    %808 = vmatprep.mubr.f32.mxu0 0.0
    %809 = vmatmul.mubr.f32.gmra.mrb[0].mxu0 %v743
    %v810 = vpop.f32.mrb[0].mxu0
    %v811 = vadd.f32 0.0, %v810
    %v812 = vpop.f32.mrb[0].mxu0
    %v813 = vadd.f32 0.0, %v812
    %814 = vdwg.mxu0
    %815 = vmatprep.subr.mxu0 0.0
    %816 = vmatpush1.msra.mxu0 %v365
    %817 = vmatprep.subr.mxu0 0.0
    %818 = vmatpush1.msra.mxu0 %v368
    %819 = vmatprep.subr.mxu0 0.0
    %820 = vmatpush1.msra.mxu0 %v371
    %821 = vmatprep.subr.mxu0 0.0
    %822 = vmatpush1.msra.mxu0 %v374
    %823 = vmatprep.subr.mxu0 0.0
    %824 = vmatpush1.msra.mxu0 %v377
    %825 = vmatprep.subr.mxu0 0.0
    %826 = vmatpush1.msra.mxu0 %v380
    %827 = vmatprep.subr.mxu0 0.0
    %828 = vmatpush1.msra.mxu0 %v383
    %829 = vmatprep.subr.mxu0 0.0
    %830 = vmatpush1.msra.mxu0 %v386
    %831 = vmatprep.subr.mxu0 0.0
    %832 = vmatpush1.msra.mxu0 %v389
    %833 = vmatprep.subr.mxu0 0.0
    %834 = vmatpush1.msra.mxu0 %v392
    %835 = vmatprep.subr.mxu0 0.0
    %836 = vmatpush1.msra.mxu0 %v395
    %837 = vmatprep.subr.mxu0 0.0
    %838 = vmatpush1.msra.mxu0 %v398
    %839 = vmatprep.subr.mxu0 0.0
    %840 = vmatpush1.msra.mxu0 %v401
    %841 = vmatprep.subr.mxu0 0.0
    %842 = vmatpush1.msra.mxu0 %v404
    %843 = vmatprep.subr.mxu0 0.0
    %844 = vmatpush1.msra.mxu0 %v407
    %845 = vmatprep.subr.mxu0 0.0
    %846 = vmatpush1.msra.mxu0 %v410
    %847 = vmatprep.subr.mxu0 0.0
    %848 = vmatpush1.msra.mxu0 0.0
    %849 = vmatprep.subr.mxu0 0.0
    %850 = vmatpush1.msra.mxu0 0.0
    %851 = vmatprep.subr.mxu0 0.0
    %852 = vmatpush1.msra.mxu0 0.0
    %853 = vmatprep.subr.mxu0 0.0
    %854 = vmatpush1.msra.mxu0 0.0
    %855 = vmatprep.subr.mxu0 0.0
    %856 = vmatpush1.msra.mxu0 0.0
    %857 = vmatprep.subr.mxu0 0.0
    %858 = vmatpush1.msra.mxu0 0.0
    %859 = vmatprep.subr.mxu0 0.0
    %860 = vmatpush1.msra.mxu0 0.0
    %861 = vmatprep.subr.mxu0 0.0
    %862 = vmatpush1.msra.mxu0 0.0
    %863 = vmatprep.subr.mxu0 0.0
    %864 = vmatpush1.msra.mxu0 0.0
    %865 = vmatprep.subr.mxu0 0.0
    %866 = vmatpush1.msra.mxu0 0.0
    %867 = vmatprep.subr.mxu0 0.0
    %868 = vmatpush1.msra.mxu0 0.0
    %869 = vmatprep.subr.mxu0 0.0
    %870 = vmatpush1.msra.mxu0 0.0
    %871 = vmatprep.subr.mxu0 0.0
    %872 = vmatpush1.msra.mxu0 0.0
    %873 = vmatprep.subr.mxu0 0.0
    %874 = vmatpush1.msra.mxu0 0.0
    %875 = vmatprep.subr.mxu0 0.0
    %876 = vmatpush1.msra.mxu0 0.0
    %877 = vmatprep.subr.mxu0 0.0
    %878 = vmatpush1.msra.mxu0 0.0
    %879 = vmatprep.mubr.f32.mxu0 0.0
    %880 = vmatmul.mubr.f32.gmra.mrb[0].mxu0 %v743
    %v881 = vpop.f32.mrb[0].mxu0
    %v882 = vadd.f32 0.0, %v881
    %v883 = vpop.f32.mrb[0].mxu0
    %884 = vdwg.mxu0
    %v885 = vadd.f32 %v224, %v811
    %v886 = vxor.u32 %v885, 2147483648
    %v887 = vmul.f32 %v886, 1.442695
    %v888 = vpow.pop %v887
    %v889 = vadd.f32 %v888, 1.0
    %v890 = vrcp.pop %v889
    %v891 = vmul.f32 1.0, %v890
    %v892 = vadd.f32 %v226, %v813
    %v893 = vxor.u32 %v892, 2147483648
    %v894 = vmul.f32 %v893, 1.442695
    %v895 = vpow.pop %v894
    %v896 = vadd.f32 %v895, 1.0
    %v897 = vrcp.pop %v896
    %v898 = vmul.f32 1.0, %v897
    %v899 = vadd.f32 %v882, %v416
    %v900 = vmul.f32 %v891, %v899
    %v901 = vadd.f32 %v335, %v900
    %v902 = vtanh.pop %v901
    %v903 = vsub.f32 1.0, %v898
    %v904 = vmul.f32 %v903, %v902
    %v905 = vmul.f32 %v898, %v743
    %v906 = vadd.f32 %v904, %v905
    %907 = vmatprep.subr.mxu0 %v364
    %908 = vmatpush1.msra.mxu0 %v363
    %909 = vmatprep.subr.mxu0 %v367
    %910 = vmatpush1.msra.mxu0 %v366
    %911 = vmatprep.subr.mxu0 %v370
    %912 = vmatpush1.msra.mxu0 %v369
    %913 = vmatprep.subr.mxu0 %v373
    %914 = vmatpush1.msra.mxu0 %v372
    %915 = vmatprep.subr.mxu0 %v376
    %916 = vmatpush1.msra.mxu0 %v375
    %917 = vmatprep.subr.mxu0 %v379
    %918 = vmatpush1.msra.mxu0 %v378
    %919 = vmatprep.subr.mxu0 %v382
    %920 = vmatpush1.msra.mxu0 %v381
    %921 = vmatprep.subr.mxu0 %v385
    %922 = vmatpush1.msra.mxu0 %v384
    %923 = vmatprep.subr.mxu0 %v388
    %924 = vmatpush1.msra.mxu0 %v387
    %925 = vmatprep.subr.mxu0 %v391
    %926 = vmatpush1.msra.mxu0 %v390
    %927 = vmatprep.subr.mxu0 %v394
    %928 = vmatpush1.msra.mxu0 %v393
    %929 = vmatprep.subr.mxu0 %v397
    %930 = vmatpush1.msra.mxu0 %v396
    %931 = vmatprep.subr.mxu0 %v400
    %932 = vmatpush1.msra.mxu0 %v399
    %933 = vmatprep.subr.mxu0 %v403
    %934 = vmatpush1.msra.mxu0 %v402
    %935 = vmatprep.subr.mxu0 %v406
    %936 = vmatpush1.msra.mxu0 %v405
    %937 = vmatprep.subr.mxu0 %v409
    %938 = vmatpush1.msra.mxu0 %v408
    %939 = vmatprep.subr.mxu0 0.0
    %940 = vmatpush1.msra.mxu0 0.0
    %941 = vmatprep.subr.mxu0 0.0
    %942 = vmatpush1.msra.mxu0 0.0
    %943 = vmatprep.subr.mxu0 0.0
    %944 = vmatpush1.msra.mxu0 0.0
    %945 = vmatprep.subr.mxu0 0.0
    %946 = vmatpush1.msra.mxu0 0.0
    %947 = vmatprep.subr.mxu0 0.0
    %948 = vmatpush1.msra.mxu0 0.0
    %949 = vmatprep.subr.mxu0 0.0
    %950 = vmatpush1.msra.mxu0 0.0
    %951 = vmatprep.subr.mxu0 0.0
    %952 = vmatpush1.msra.mxu0 0.0
    %953 = vmatprep.subr.mxu0 0.0
    %954 = vmatpush1.msra.mxu0 0.0
    %955 = vmatprep.subr.mxu0 0.0
    %956 = vmatpush1.msra.mxu0 0.0
    %957 = vmatprep.subr.mxu0 0.0
    %958 = vmatpush1.msra.mxu0 0.0
    %959 = vmatprep.subr.mxu0 0.0
    %960 = vmatpush1.msra.mxu0 0.0
    %961 = vmatprep.subr.mxu0 0.0
    %962 = vmatpush1.msra.mxu0 0.0
    %963 = vmatprep.subr.mxu0 0.0
    %964 = vmatpush1.msra.mxu0 0.0
    %965 = vmatprep.subr.mxu0 0.0
    %966 = vmatpush1.msra.mxu0 0.0
    %967 = vmatprep.subr.mxu0 0.0
    %968 = vmatpush1.msra.mxu0 0.0
    %969 = vmatprep.subr.mxu0 0.0
    %970 = vmatpush1.msra.mxu0 0.0
    %971 = vmatprep.mubr.f32.mxu0 0.0
    %972 = vmatmul.mubr.f32.gmra.mrb[0].mxu0 %v906
    %v973 = vpop.f32.mrb[0].mxu0
    %v974 = vadd.f32 0.0, %v973
    %v975 = vpop.f32.mrb[0].mxu0
    %v976 = vadd.f32 0.0, %v975
    %977 = vdwg.mxu0
    %978 = vmatprep.subr.mxu0 0.0
    %979 = vmatpush1.msra.mxu0 %v365
    %980 = vmatprep.subr.mxu0 0.0
    %981 = vmatpush1.msra.mxu0 %v368
    %982 = vmatprep.subr.mxu0 0.0
    %983 = vmatpush1.msra.mxu0 %v371
    %984 = vmatprep.subr.mxu0 0.0
    %985 = vmatpush1.msra.mxu0 %v374
    %986 = vmatprep.subr.mxu0 0.0
    %987 = vmatpush1.msra.mxu0 %v377
    %988 = vmatprep.subr.mxu0 0.0
    %989 = vmatpush1.msra.mxu0 %v380
    %990 = vmatprep.subr.mxu0 0.0
    %991 = vmatpush1.msra.mxu0 %v383
    %992 = vmatprep.subr.mxu0 0.0
    %993 = vmatpush1.msra.mxu0 %v386
    %994 = vmatprep.subr.mxu0 0.0
    %995 = vmatpush1.msra.mxu0 %v389
    %996 = vmatprep.subr.mxu0 0.0
    %997 = vmatpush1.msra.mxu0 %v392
    %998 = vmatprep.subr.mxu0 0.0
    %999 = vmatpush1.msra.mxu0 %v395
    %1000 = vmatprep.subr.mxu0 0.0
    %1001 = vmatpush1.msra.mxu0 %v398
    %1002 = vmatprep.subr.mxu0 0.0
    %1003 = vmatpush1.msra.mxu0 %v401
    %1004 = vmatprep.subr.mxu0 0.0
    %1005 = vmatpush1.msra.mxu0 %v404
    %1006 = vmatprep.subr.mxu0 0.0
    %1007 = vmatpush1.msra.mxu0 %v407
    %1008 = vmatprep.subr.mxu0 0.0
    %1009 = vmatpush1.msra.mxu0 %v410
    %1010 = vmatprep.subr.mxu0 0.0
    %1011 = vmatpush1.msra.mxu0 0.0
    %1012 = vmatprep.subr.mxu0 0.0
    %1013 = vmatpush1.msra.mxu0 0.0
    %1014 = vmatprep.subr.mxu0 0.0
    %1015 = vmatpush1.msra.mxu0 0.0
    %1016 = vmatprep.subr.mxu0 0.0
    %1017 = vmatpush1.msra.mxu0 0.0
    %1018 = vmatprep.subr.mxu0 0.0
    %1019 = vmatpush1.msra.mxu0 0.0
    %1020 = vmatprep.subr.mxu0 0.0
    %1021 = vmatpush1.msra.mxu0 0.0
    %1022 = vmatprep.subr.mxu0 0.0
    %1023 = vmatpush1.msra.mxu0 0.0
    %1024 = vmatprep.subr.mxu0 0.0
    %1025 = vmatpush1.msra.mxu0 0.0
    %1026 = vmatprep.subr.mxu0 0.0
    %1027 = vmatpush1.msra.mxu0 0.0
    %1028 = vmatprep.subr.mxu0 0.0
    %1029 = vmatpush1.msra.mxu0 0.0
    %1030 = vmatprep.subr.mxu0 0.0
    %1031 = vmatpush1.msra.mxu0 0.0
    %1032 = vmatprep.subr.mxu0 0.0
    %1033 = vmatpush1.msra.mxu0 0.0
    %1034 = vmatprep.subr.mxu0 0.0
    %1035 = vmatpush1.msra.mxu0 0.0
    %1036 = vmatprep.subr.mxu0 0.0
    %1037 = vmatpush1.msra.mxu0 0.0
    %1038 = vmatprep.subr.mxu0 0.0
    %1039 = vmatpush1.msra.mxu0 0.0
    %1040 = vmatprep.subr.mxu0 0.0
    %1041 = vmatpush1.msra.mxu0 0.0
    %1042 = vmatprep.mubr.f32.mxu0 0.0
    %1043 = vmatmul.mubr.f32.gmra.mrb[0].mxu0 %v906
    %v1044 = vpop.f32.mrb[0].mxu0
    %v1045 = vadd.f32 0.0, %v1044
    %v1046 = vpop.f32.mrb[0].mxu0
    %1047 = vdwg.mxu0
    %v1048 = vadd.f32 %v230, %v974
    %v1049 = vxor.u32 %v1048, 2147483648
    %v1050 = vmul.f32 %v1049, 1.442695
    %v1051 = vpow.pop %v1050
    %v1052 = vadd.f32 %v1051, 1.0
    %v1053 = vrcp.pop %v1052
    %v1054 = vmul.f32 1.0, %v1053
    %v1055 = vadd.f32 %v232, %v976
    %v1056 = vxor.u32 %v1055, 2147483648
    %v1057 = vmul.f32 %v1056, 1.442695
    %v1058 = vpow.pop %v1057
    %v1059 = vadd.f32 %v1058, 1.0
    %v1060 = vrcp.pop %v1059
    %v1061 = vmul.f32 1.0, %v1060
    %v1062 = vadd.f32 %v1045, %v416
    %v1063 = vmul.f32 %v1054, %v1062
    %v1064 = vadd.f32 %v340, %v1063
    %v1065 = vtanh.pop %v1064
    %v1066 = vsub.f32 1.0, %v1061
    %v1067 = vmul.f32 %v1066, %v1065
    %v1068 = vmul.f32 %v1061, %v906
    %v1069 = vadd.f32 %v1067, %v1068
    %1070 = vmatprep.subr.mxu0 %v364
    %1071 = vmatpush1.msra.mxu0 %v363
    %1072 = vmatprep.subr.mxu0 %v367
    %1073 = vmatpush1.msra.mxu0 %v366
    %1074 = vmatprep.subr.mxu0 %v370
    %1075 = vmatpush1.msra.mxu0 %v369
    %1076 = vmatprep.subr.mxu0 %v373
    %1077 = vmatpush1.msra.mxu0 %v372
    %1078 = vmatprep.subr.mxu0 %v376
    %1079 = vmatpush1.msra.mxu0 %v375
    %1080 = vmatprep.subr.mxu0 %v379
    %1081 = vmatpush1.msra.mxu0 %v378
    %1082 = vmatprep.subr.mxu0 %v382
    %1083 = vmatpush1.msra.mxu0 %v381
    %1084 = vmatprep.subr.mxu0 %v385
    %1085 = vmatpush1.msra.mxu0 %v384
    %1086 = vmatprep.subr.mxu0 %v388
    %1087 = vmatpush1.msra.mxu0 %v387
    %1088 = vmatprep.subr.mxu0 %v391
    %1089 = vmatpush1.msra.mxu0 %v390
    %1090 = vmatprep.subr.mxu0 %v394
    %1091 = vmatpush1.msra.mxu0 %v393
    %1092 = vmatprep.subr.mxu0 %v397
    %1093 = vmatpush1.msra.mxu0 %v396
    %1094 = vmatprep.subr.mxu0 %v400
    %1095 = vmatpush1.msra.mxu0 %v399
    %1096 = vmatprep.subr.mxu0 %v403
    %1097 = vmatpush1.msra.mxu0 %v402
    %1098 = vmatprep.subr.mxu0 %v406
    %1099 = vmatpush1.msra.mxu0 %v405
    %1100 = vmatprep.subr.mxu0 %v409
    %1101 = vmatpush1.msra.mxu0 %v408
    %1102 = vmatprep.subr.mxu0 0.0
    %1103 = vmatpush1.msra.mxu0 0.0
    %1104 = vmatprep.subr.mxu0 0.0
    %1105 = vmatpush1.msra.mxu0 0.0
    %1106 = vmatprep.subr.mxu0 0.0
    %1107 = vmatpush1.msra.mxu0 0.0
    %1108 = vmatprep.subr.mxu0 0.0
    %1109 = vmatpush1.msra.mxu0 0.0
    %1110 = vmatprep.subr.mxu0 0.0
    %1111 = vmatpush1.msra.mxu0 0.0
    %1112 = vmatprep.subr.mxu0 0.0
    %1113 = vmatpush1.msra.mxu0 0.0
    %1114 = vmatprep.subr.mxu0 0.0
    %1115 = vmatpush1.msra.mxu0 0.0
    %1116 = vmatprep.subr.mxu0 0.0
    %1117 = vmatpush1.msra.mxu0 0.0
    %1118 = vmatprep.subr.mxu0 0.0
    %1119 = vmatpush1.msra.mxu0 0.0
    %1120 = vmatprep.subr.mxu0 0.0
    %1121 = vmatpush1.msra.mxu0 0.0
    %1122 = vmatprep.subr.mxu0 0.0
    %1123 = vmatpush1.msra.mxu0 0.0
    %1124 = vmatprep.subr.mxu0 0.0
    %1125 = vmatpush1.msra.mxu0 0.0
    %1126 = vmatprep.subr.mxu0 0.0
    %1127 = vmatpush1.msra.mxu0 0.0
    %1128 = vmatprep.subr.mxu0 0.0
    %1129 = vmatpush1.msra.mxu0 0.0
    %1130 = vmatprep.subr.mxu0 0.0
    %1131 = vmatpush1.msra.mxu0 0.0
    %1132 = vmatprep.subr.mxu0 0.0
    %1133 = vmatpush1.msra.mxu0 0.0
    %1134 = vmatprep.mubr.f32.mxu0 0.0
    %1135 = vmatmul.mubr.f32.gmra.mrb[0].mxu0 %v1069
    %v1136 = vpop.f32.mrb[0].mxu0
    %v1137 = vadd.f32 0.0, %v1136
    %v1138 = vpop.f32.mrb[0].mxu0
    %v1139 = vadd.f32 0.0, %v1138
    %1140 = vdwg.mxu0
    %1141 = vmatprep.subr.mxu0 0.0
    %1142 = vmatpush1.msra.mxu0 %v365
    %1143 = vmatprep.subr.mxu0 0.0
    %1144 = vmatpush1.msra.mxu0 %v368
    %1145 = vmatprep.subr.mxu0 0.0
    %1146 = vmatpush1.msra.mxu0 %v371
    %1147 = vmatprep.subr.mxu0 0.0
    %1148 = vmatpush1.msra.mxu0 %v374
    %1149 = vmatprep.subr.mxu0 0.0
    %1150 = vmatpush1.msra.mxu0 %v377
    %1151 = vmatprep.subr.mxu0 0.0
    %1152 = vmatpush1.msra.mxu0 %v380
    %1153 = vmatprep.subr.mxu0 0.0
    %1154 = vmatpush1.msra.mxu0 %v383
    %1155 = vmatprep.subr.mxu0 0.0
    %1156 = vmatpush1.msra.mxu0 %v386
    %1157 = vmatprep.subr.mxu0 0.0
    %1158 = vmatpush1.msra.mxu0 %v389
    %1159 = vmatprep.subr.mxu0 0.0
    %1160 = vmatpush1.msra.mxu0 %v392
    %1161 = vmatprep.subr.mxu0 0.0
    %1162 = vmatpush1.msra.mxu0 %v395
    %1163 = vmatprep.subr.mxu0 0.0
    %1164 = vmatpush1.msra.mxu0 %v398
    %1165 = vmatprep.subr.mxu0 0.0
    %1166 = vmatpush1.msra.mxu0 %v401
    %1167 = vmatprep.subr.mxu0 0.0
    %1168 = vmatpush1.msra.mxu0 %v404
    %1169 = vmatprep.subr.mxu0 0.0
    %1170 = vmatpush1.msra.mxu0 %v407
    %1171 = vmatprep.subr.mxu0 0.0
    %1172 = vmatpush1.msra.mxu0 %v410
    %1173 = vmatprep.subr.mxu0 0.0
    %1174 = vmatpush1.msra.mxu0 0.0
    %1175 = vmatprep.subr.mxu0 0.0
    %1176 = vmatpush1.msra.mxu0 0.0
    %1177 = vmatprep.subr.mxu0 0.0
    %1178 = vmatpush1.msra.mxu0 0.0
    %1179 = vmatprep.subr.mxu0 0.0
    %1180 = vmatpush1.msra.mxu0 0.0
    %1181 = vmatprep.subr.mxu0 0.0
    %1182 = vmatpush1.msra.mxu0 0.0
    %1183 = vmatprep.subr.mxu0 0.0
    %1184 = vmatpush1.msra.mxu0 0.0
    %1185 = vmatprep.subr.mxu0 0.0
    %1186 = vmatpush1.msra.mxu0 0.0
    %1187 = vmatprep.subr.mxu0 0.0
    %1188 = vmatpush1.msra.mxu0 0.0
    %1189 = vmatprep.subr.mxu0 0.0
    %1190 = vmatpush1.msra.mxu0 0.0
    %1191 = vmatprep.subr.mxu0 0.0
    %1192 = vmatpush1.msra.mxu0 0.0
    %1193 = vmatprep.subr.mxu0 0.0
    %1194 = vmatpush1.msra.mxu0 0.0
    %1195 = vmatprep.subr.mxu0 0.0
    %1196 = vmatpush1.msra.mxu0 0.0
    %1197 = vmatprep.subr.mxu0 0.0
    %1198 = vmatpush1.msra.mxu0 0.0
    %1199 = vmatprep.subr.mxu0 0.0
    %1200 = vmatpush1.msra.mxu0 0.0
    %1201 = vmatprep.subr.mxu0 0.0
    %1202 = vmatpush1.msra.mxu0 0.0
    %1203 = vmatprep.subr.mxu0 0.0
    %1204 = vmatpush1.msra.mxu0 0.0
    %1205 = vmatprep.mubr.f32.mxu0 0.0
    %1206 = vmatmul.mubr.f32.gmra.mrb[0].mxu0 %v1069
    %v1207 = vpop.f32.mrb[0].mxu0
    %v1208 = vadd.f32 0.0, %v1207
    %v1209 = vpop.f32.mrb[0].mxu0
    %1210 = vdwg.mxu0
    %v1211 = vadd.f32 %v236, %v1137
    %v1212 = vxor.u32 %v1211, 2147483648
    %v1213 = vmul.f32 %v1212, 1.442695
    %v1214 = vpow.pop %v1213
    %v1215 = vadd.f32 %v1214, 1.0
    %v1216 = vrcp.pop %v1215
    %v1217 = vmul.f32 1.0, %v1216
    %v1218 = vadd.f32 %v238, %v1139
    %v1219 = vxor.u32 %v1218, 2147483648
    %v1220 = vmul.f32 %v1219, 1.442695
    %v1221 = vpow.pop %v1220
    %v1222 = vadd.f32 %v1221, 1.0
    %v1223 = vrcp.pop %v1222
    %v1224 = vmul.f32 1.0, %v1223
    %v1225 = vadd.f32 %v1208, %v416
    %v1226 = vmul.f32 %v1217, %v1225
    %v1227 = vadd.f32 %v345, %v1226
    %v1228 = vtanh.pop %v1227
    %v1229 = vsub.f32 1.0, %v1224
    %v1230 = vmul.f32 %v1229, %v1228
    %v1231 = vmul.f32 %v1224, %v1069
    %v1232 = vadd.f32 %v1230, %v1231
    %1233 = vmatprep.subr.mxu0 %v364
    %1234 = vmatpush1.msra.mxu0 %v363
    %1235 = vmatprep.subr.mxu0 %v367
    %1236 = vmatpush1.msra.mxu0 %v366
    %1237 = vmatprep.subr.mxu0 %v370
    %1238 = vmatpush1.msra.mxu0 %v369
    %1239 = vmatprep.subr.mxu0 %v373
    %1240 = vmatpush1.msra.mxu0 %v372
    %1241 = vmatprep.subr.mxu0 %v376
    %1242 = vmatpush1.msra.mxu0 %v375
    %1243 = vmatprep.subr.mxu0 %v379
    %1244 = vmatpush1.msra.mxu0 %v378
    %1245 = vmatprep.subr.mxu0 %v382
    %1246 = vmatpush1.msra.mxu0 %v381
    %1247 = vmatprep.subr.mxu0 %v385
    %1248 = vmatpush1.msra.mxu0 %v384
    %1249 = vmatprep.subr.mxu0 %v388
    %1250 = vmatpush1.msra.mxu0 %v387
    %1251 = vmatprep.subr.mxu0 %v391
    %1252 = vmatpush1.msra.mxu0 %v390
    %1253 = vmatprep.subr.mxu0 %v394
    %1254 = vmatpush1.msra.mxu0 %v393
    %1255 = vmatprep.subr.mxu0 %v397
    %1256 = vmatpush1.msra.mxu0 %v396
    %1257 = vmatprep.subr.mxu0 %v400
    %1258 = vmatpush1.msra.mxu0 %v399
    %1259 = vmatprep.subr.mxu0 %v403
    %1260 = vmatpush1.msra.mxu0 %v402
    %1261 = vmatprep.subr.mxu0 %v406
    %1262 = vmatpush1.msra.mxu0 %v405
    %1263 = vmatprep.subr.mxu0 %v409
    %1264 = vmatpush1.msra.mxu0 %v408
    %1265 = vmatprep.subr.mxu0 0.0
    %1266 = vmatpush1.msra.mxu0 0.0
    %1267 = vmatprep.subr.mxu0 0.0
    %1268 = vmatpush1.msra.mxu0 0.0
    %1269 = vmatprep.subr.mxu0 0.0
    %1270 = vmatpush1.msra.mxu0 0.0
    %1271 = vmatprep.subr.mxu0 0.0
    %1272 = vmatpush1.msra.mxu0 0.0
    %1273 = vmatprep.subr.mxu0 0.0
    %1274 = vmatpush1.msra.mxu0 0.0
    %1275 = vmatprep.subr.mxu0 0.0
    %1276 = vmatpush1.msra.mxu0 0.0
    %1277 = vmatprep.subr.mxu0 0.0
    %1278 = vmatpush1.msra.mxu0 0.0
    %1279 = vmatprep.subr.mxu0 0.0
    %1280 = vmatpush1.msra.mxu0 0.0
    %1281 = vmatprep.subr.mxu0 0.0
    %1282 = vmatpush1.msra.mxu0 0.0
    %1283 = vmatprep.subr.mxu0 0.0
    %1284 = vmatpush1.msra.mxu0 0.0
    %1285 = vmatprep.subr.mxu0 0.0
    %1286 = vmatpush1.msra.mxu0 0.0
    %1287 = vmatprep.subr.mxu0 0.0
    %1288 = vmatpush1.msra.mxu0 0.0
    %1289 = vmatprep.subr.mxu0 0.0
    %1290 = vmatpush1.msra.mxu0 0.0
    %1291 = vmatprep.subr.mxu0 0.0
    %1292 = vmatpush1.msra.mxu0 0.0
    %1293 = vmatprep.subr.mxu0 0.0
    %1294 = vmatpush1.msra.mxu0 0.0
    %1295 = vmatprep.subr.mxu0 0.0
    %1296 = vmatpush1.msra.mxu0 0.0
    %1297 = vmatprep.mubr.f32.mxu0 0.0
    %1298 = vmatmul.mubr.f32.gmra.mrb[0].mxu0 %v1232
    %v1299 = vpop.f32.mrb[0].mxu0
    %v1300 = vadd.f32 0.0, %v1299
    %v1301 = vpop.f32.mrb[0].mxu0
    %v1302 = vadd.f32 0.0, %v1301
    %1303 = vdwg.mxu0
    %1304 = vmatprep.subr.mxu0 0.0
    %1305 = vmatpush1.msra.mxu0 %v365
    %1306 = vmatprep.subr.mxu0 0.0
    %1307 = vmatpush1.msra.mxu0 %v368
    %1308 = vmatprep.subr.mxu0 0.0
    %1309 = vmatpush1.msra.mxu0 %v371
    %1310 = vmatprep.subr.mxu0 0.0
    %1311 = vmatpush1.msra.mxu0 %v374
    %1312 = vmatprep.subr.mxu0 0.0
    %1313 = vmatpush1.msra.mxu0 %v377
    %1314 = vmatprep.subr.mxu0 0.0
    %1315 = vmatpush1.msra.mxu0 %v380
    %1316 = vmatprep.subr.mxu0 0.0
    %1317 = vmatpush1.msra.mxu0 %v383
    %1318 = vmatprep.subr.mxu0 0.0
    %1319 = vmatpush1.msra.mxu0 %v386
    %1320 = vmatprep.subr.mxu0 0.0
    %1321 = vmatpush1.msra.mxu0 %v389
    %1322 = vmatprep.subr.mxu0 0.0
    %1323 = vmatpush1.msra.mxu0 %v392
    %1324 = vmatprep.subr.mxu0 0.0
    %1325 = vmatpush1.msra.mxu0 %v395
    %1326 = vmatprep.subr.mxu0 0.0
    %1327 = vmatpush1.msra.mxu0 %v398
    %1328 = vmatprep.subr.mxu0 0.0
    %1329 = vmatpush1.msra.mxu0 %v401
    %1330 = vmatprep.subr.mxu0 0.0
    %1331 = vmatpush1.msra.mxu0 %v404
    %1332 = vmatprep.subr.mxu0 0.0
    %1333 = vmatpush1.msra.mxu0 %v407
    %1334 = vmatprep.subr.mxu0 0.0
    %1335 = vmatpush1.msra.mxu0 %v410
    %1336 = vmatprep.subr.mxu0 0.0
    %1337 = vmatpush1.msra.mxu0 0.0
    %1338 = vmatprep.subr.mxu0 0.0
    %1339 = vmatpush1.msra.mxu0 0.0
    %1340 = vmatprep.subr.mxu0 0.0
    %1341 = vmatpush1.msra.mxu0 0.0
    %1342 = vmatprep.subr.mxu0 0.0
    %1343 = vmatpush1.msra.mxu0 0.0
    %1344 = vmatprep.subr.mxu0 0.0
    %1345 = vmatpush1.msra.mxu0 0.0
    %1346 = vmatprep.subr.mxu0 0.0
    %1347 = vmatpush1.msra.mxu0 0.0
    %1348 = vmatprep.subr.mxu0 0.0
    %1349 = vmatpush1.msra.mxu0 0.0
    %1350 = vmatprep.subr.mxu0 0.0
    %1351 = vmatpush1.msra.mxu0 0.0
    %1352 = vmatprep.subr.mxu0 0.0
    %1353 = vmatpush1.msra.mxu0 0.0
    %1354 = vmatprep.subr.mxu0 0.0
    %1355 = vmatpush1.msra.mxu0 0.0
    %1356 = vmatprep.subr.mxu0 0.0
    %1357 = vmatpush1.msra.mxu0 0.0
    %1358 = vmatprep.subr.mxu0 0.0
    %1359 = vmatpush1.msra.mxu0 0.0
    %1360 = vmatprep.subr.mxu0 0.0
    %1361 = vmatpush1.msra.mxu0 0.0
    %1362 = vmatprep.subr.mxu0 0.0
    %1363 = vmatpush1.msra.mxu0 0.0
    %1364 = vmatprep.subr.mxu0 0.0
    %1365 = vmatpush1.msra.mxu0 0.0
    %1366 = vmatprep.subr.mxu0 0.0
    %1367 = vmatpush1.msra.mxu0 0.0
    %1368 = vmatprep.mubr.f32.mxu0 0.0
    %1369 = vmatmul.mubr.f32.gmra.mrb[0].mxu0 %v1232
    %v1370 = vpop.f32.mrb[0].mxu0
    %v1371 = vadd.f32 0.0, %v1370
    %v1372 = vpop.f32.mrb[0].mxu0
    %1373 = vdwg.mxu0
    %v1374 = vadd.f32 %v242, %v1300
    %v1375 = vxor.u32 %v1374, 2147483648
    %v1376 = vmul.f32 %v1375, 1.442695
    %v1377 = vpow.pop %v1376
    %v1378 = vadd.f32 %v1377, 1.0
    %v1379 = vrcp.pop %v1378
    %v1380 = vmul.f32 1.0, %v1379
    %v1381 = vadd.f32 %v244, %v1302
    %v1382 = vxor.u32 %v1381, 2147483648
    %v1383 = vmul.f32 %v1382, 1.442695
    %v1384 = vpow.pop %v1383
    %v1385 = vadd.f32 %v1384, 1.0
    %v1386 = vrcp.pop %v1385
    %v1387 = vmul.f32 1.0, %v1386
    %v1388 = vadd.f32 %v1371, %v416
    %v1389 = vmul.f32 %v1380, %v1388
    %v1390 = vadd.f32 %v350, %v1389
    %v1391 = vtanh.pop %v1390
    %v1392 = vsub.f32 1.0, %v1387
    %v1393 = vmul.f32 %v1392, %v1391
    %v1394 = vmul.f32 %v1387, %v1232
    %v1395 = vadd.f32 %v1393, %v1394
    %1396 = vmatprep.subr.mxu0 %v364
    %1397 = vmatpush1.msra.mxu0 %v363
    %1398 = vmatprep.subr.mxu0 %v367
    %1399 = vmatpush1.msra.mxu0 %v366
    %1400 = vmatprep.subr.mxu0 %v370
    %1401 = vmatpush1.msra.mxu0 %v369
    %1402 = vmatprep.subr.mxu0 %v373
    %1403 = vmatpush1.msra.mxu0 %v372
    %1404 = vmatprep.subr.mxu0 %v376
    %1405 = vmatpush1.msra.mxu0 %v375
    %1406 = vmatprep.subr.mxu0 %v379
    %1407 = vmatpush1.msra.mxu0 %v378
    %1408 = vmatprep.subr.mxu0 %v382
    %1409 = vmatpush1.msra.mxu0 %v381
    %1410 = vmatprep.subr.mxu0 %v385
    %1411 = vmatpush1.msra.mxu0 %v384
    %1412 = vmatprep.subr.mxu0 %v388
    %1413 = vmatpush1.msra.mxu0 %v387
    %1414 = vmatprep.subr.mxu0 %v391
    %1415 = vmatpush1.msra.mxu0 %v390
    %1416 = vmatprep.subr.mxu0 %v394
    %1417 = vmatpush1.msra.mxu0 %v393
    %1418 = vmatprep.subr.mxu0 %v397
    %1419 = vmatpush1.msra.mxu0 %v396
    %1420 = vmatprep.subr.mxu0 %v400
    %1421 = vmatpush1.msra.mxu0 %v399
    %1422 = vmatprep.subr.mxu0 %v403
    %1423 = vmatpush1.msra.mxu0 %v402
    %1424 = vmatprep.subr.mxu0 %v406
    %1425 = vmatpush1.msra.mxu0 %v405
    %1426 = vmatprep.subr.mxu0 %v409
    %1427 = vmatpush1.msra.mxu0 %v408
    %1428 = vmatprep.subr.mxu0 0.0
    %1429 = vmatpush1.msra.mxu0 0.0
    %1430 = vmatprep.subr.mxu0 0.0
    %1431 = vmatpush1.msra.mxu0 0.0
    %1432 = vmatprep.subr.mxu0 0.0
    %1433 = vmatpush1.msra.mxu0 0.0
    %1434 = vmatprep.subr.mxu0 0.0
    %1435 = vmatpush1.msra.mxu0 0.0
    %1436 = vmatprep.subr.mxu0 0.0
    %1437 = vmatpush1.msra.mxu0 0.0
    %1438 = vmatprep.subr.mxu0 0.0
    %1439 = vmatpush1.msra.mxu0 0.0
    %1440 = vmatprep.subr.mxu0 0.0
    %1441 = vmatpush1.msra.mxu0 0.0
    %1442 = vmatprep.subr.mxu0 0.0
    %1443 = vmatpush1.msra.mxu0 0.0
    %1444 = vmatprep.subr.mxu0 0.0
    %1445 = vmatpush1.msra.mxu0 0.0
    %1446 = vmatprep.subr.mxu0 0.0
    %1447 = vmatpush1.msra.mxu0 0.0
    %1448 = vmatprep.subr.mxu0 0.0
    %1449 = vmatpush1.msra.mxu0 0.0
    %1450 = vmatprep.subr.mxu0 0.0
    %1451 = vmatpush1.msra.mxu0 0.0
    %1452 = vmatprep.subr.mxu0 0.0
    %1453 = vmatpush1.msra.mxu0 0.0
    %1454 = vmatprep.subr.mxu0 0.0
    %1455 = vmatpush1.msra.mxu0 0.0
    %1456 = vmatprep.subr.mxu0 0.0
    %1457 = vmatpush1.msra.mxu0 0.0
    %1458 = vmatprep.subr.mxu0 0.0
    %1459 = vmatpush1.msra.mxu0 0.0
    %1460 = vmatprep.mubr.f32.mxu0 0.0
    %1461 = vmatmul.mubr.f32.gmra.mrb[0].mxu0 %v1395
    %v1462 = vpop.f32.mrb[0].mxu0
    %v1463 = vadd.f32 0.0, %v1462
    %v1464 = vpop.f32.mrb[0].mxu0
    %v1465 = vadd.f32 0.0, %v1464
    %1466 = vdwg.mxu0
    %1467 = vmatprep.subr.mxu0 0.0
    %1468 = vmatpush1.msra.mxu0 %v365
    %1469 = vmatprep.subr.mxu0 0.0
    %1470 = vmatpush1.msra.mxu0 %v368
    %1471 = vmatprep.subr.mxu0 0.0
    %1472 = vmatpush1.msra.mxu0 %v371
    %1473 = vmatprep.subr.mxu0 0.0
    %1474 = vmatpush1.msra.mxu0 %v374
    %1475 = vmatprep.subr.mxu0 0.0
    %1476 = vmatpush1.msra.mxu0 %v377
    %1477 = vmatprep.subr.mxu0 0.0
    %1478 = vmatpush1.msra.mxu0 %v380
    %1479 = vmatprep.subr.mxu0 0.0
    %1480 = vmatpush1.msra.mxu0 %v383
    %1481 = vmatprep.subr.mxu0 0.0
    %1482 = vmatpush1.msra.mxu0 %v386
    %1483 = vmatprep.subr.mxu0 0.0
    %1484 = vmatpush1.msra.mxu0 %v389
    %1485 = vmatprep.subr.mxu0 0.0
    %1486 = vmatpush1.msra.mxu0 %v392
    %1487 = vmatprep.subr.mxu0 0.0
    %1488 = vmatpush1.msra.mxu0 %v395
    %1489 = vmatprep.subr.mxu0 0.0
    %1490 = vmatpush1.msra.mxu0 %v398
    %1491 = vmatprep.subr.mxu0 0.0
    %1492 = vmatpush1.msra.mxu0 %v401
    %1493 = vmatprep.subr.mxu0 0.0
    %1494 = vmatpush1.msra.mxu0 %v404
    %1495 = vmatprep.subr.mxu0 0.0
    %1496 = vmatpush1.msra.mxu0 %v407
    %1497 = vmatprep.subr.mxu0 0.0
    %1498 = vmatpush1.msra.mxu0 %v410
    %1499 = vmatprep.subr.mxu0 0.0
    %1500 = vmatpush1.msra.mxu0 0.0
    %1501 = vmatprep.subr.mxu0 0.0
    %1502 = vmatpush1.msra.mxu0 0.0
    %1503 = vmatprep.subr.mxu0 0.0
    %1504 = vmatpush1.msra.mxu0 0.0
    %1505 = vmatprep.subr.mxu0 0.0
    %1506 = vmatpush1.msra.mxu0 0.0
    %1507 = vmatprep.subr.mxu0 0.0
    %1508 = vmatpush1.msra.mxu0 0.0
    %1509 = vmatprep.subr.mxu0 0.0
    %1510 = vmatpush1.msra.mxu0 0.0
    %1511 = vmatprep.subr.mxu0 0.0
    %1512 = vmatpush1.msra.mxu0 0.0
    %1513 = vmatprep.subr.mxu0 0.0
    %1514 = vmatpush1.msra.mxu0 0.0
    %1515 = vmatprep.subr.mxu0 0.0
    %1516 = vmatpush1.msra.mxu0 0.0
    %1517 = vmatprep.subr.mxu0 0.0
    %1518 = vmatpush1.msra.mxu0 0.0
    %1519 = vmatprep.subr.mxu0 0.0
    %1520 = vmatpush1.msra.mxu0 0.0
    %1521 = vmatprep.subr.mxu0 0.0
    %1522 = vmatpush1.msra.mxu0 0.0
    %1523 = vmatprep.subr.mxu0 0.0
    %1524 = vmatpush1.msra.mxu0 0.0
    %1525 = vmatprep.subr.mxu0 0.0
    %1526 = vmatpush1.msra.mxu0 0.0
    %1527 = vmatprep.subr.mxu0 0.0
    %1528 = vmatpush1.msra.mxu0 0.0
    %1529 = vmatprep.subr.mxu0 0.0
    %1530 = vmatpush1.msra.mxu0 0.0
    %1531 = vmatprep.mubr.f32.mxu0 0.0
    %1532 = vmatmul.mubr.f32.gmra.mrb[0].mxu0 %v1395
    %v1533 = vpop.f32.mrb[0].mxu0
    %v1534 = vadd.f32 0.0, %v1533
    %v1535 = vpop.f32.mrb[0].mxu0
    %1536 = vdwg.mxu0
    %v1537 = vadd.f32 %v248, %v1463
    %v1538 = vxor.u32 %v1537, 2147483648
    %v1539 = vmul.f32 %v1538, 1.442695
    %v1540 = vpow.pop %v1539
    %v1541 = vadd.f32 %v1540, 1.0
    %v1542 = vrcp.pop %v1541
    %v1543 = vmul.f32 1.0, %v1542
    %v1544 = vadd.f32 %v250, %v1465
    %v1545 = vxor.u32 %v1544, 2147483648
    %v1546 = vmul.f32 %v1545, 1.442695
    %v1547 = vpow.pop %v1546
    %v1548 = vadd.f32 %v1547, 1.0
    %v1549 = vrcp.pop %v1548
    %v1550 = vmul.f32 1.0, %v1549
    %v1551 = vadd.f32 %v1534, %v416
    %v1552 = vmul.f32 %v1543, %v1551
    %v1553 = vadd.f32 %v355, %v1552
    %v1554 = vtanh.pop %v1553
    %v1555 = vsub.f32 1.0, %v1550
    %v1556 = vmul.f32 %v1555, %v1554
    %v1557 = vmul.f32 %v1550, %v1395
    %v1558 = vadd.f32 %v1556, %v1557
    %1559 = vmatprep.subr.mxu0 %v364
    %1560 = vmatpush1.msra.mxu0 %v363
    %1561 = vmatprep.subr.mxu0 %v367
    %1562 = vmatpush1.msra.mxu0 %v366
    %1563 = vmatprep.subr.mxu0 %v370
    %1564 = vmatpush1.msra.mxu0 %v369
    %1565 = vmatprep.subr.mxu0 %v373
    %1566 = vmatpush1.msra.mxu0 %v372
    %1567 = vmatprep.subr.mxu0 %v376
    %1568 = vmatpush1.msra.mxu0 %v375
    %1569 = vmatprep.subr.mxu0 %v379
    %1570 = vmatpush1.msra.mxu0 %v378
    %1571 = vmatprep.subr.mxu0 %v382
    %1572 = vmatpush1.msra.mxu0 %v381
    %1573 = vmatprep.subr.mxu0 %v385
    %1574 = vmatpush1.msra.mxu0 %v384
    %1575 = vmatprep.subr.mxu0 %v388
    %1576 = vmatpush1.msra.mxu0 %v387
    %1577 = vmatprep.subr.mxu0 %v391
    %1578 = vmatpush1.msra.mxu0 %v390
    %1579 = vmatprep.subr.mxu0 %v394
    %1580 = vmatpush1.msra.mxu0 %v393
    %1581 = vmatprep.subr.mxu0 %v397
    %1582 = vmatpush1.msra.mxu0 %v396
    %1583 = vmatprep.subr.mxu0 %v400
    %1584 = vmatpush1.msra.mxu0 %v399
    %1585 = vmatprep.subr.mxu0 %v403
    %1586 = vmatpush1.msra.mxu0 %v402
    %1587 = vmatprep.subr.mxu0 %v406
    %1588 = vmatpush1.msra.mxu0 %v405
    %1589 = vmatprep.subr.mxu0 %v409
    %1590 = vmatpush1.msra.mxu0 %v408
    %1591 = vmatprep.subr.mxu0 0.0
    %1592 = vmatpush1.msra.mxu0 0.0
    %1593 = vmatprep.subr.mxu0 0.0
    %1594 = vmatpush1.msra.mxu0 0.0
    %1595 = vmatprep.subr.mxu0 0.0
    %1596 = vmatpush1.msra.mxu0 0.0
    %1597 = vmatprep.subr.mxu0 0.0
    %1598 = vmatpush1.msra.mxu0 0.0
    %1599 = vmatprep.subr.mxu0 0.0
    %1600 = vmatpush1.msra.mxu0 0.0
    %1601 = vmatprep.subr.mxu0 0.0
    %1602 = vmatpush1.msra.mxu0 0.0
    %1603 = vmatprep.subr.mxu0 0.0
    %1604 = vmatpush1.msra.mxu0 0.0
    %1605 = vmatprep.subr.mxu0 0.0
    %1606 = vmatpush1.msra.mxu0 0.0
    %1607 = vmatprep.subr.mxu0 0.0
    %1608 = vmatpush1.msra.mxu0 0.0
    %1609 = vmatprep.subr.mxu0 0.0
    %1610 = vmatpush1.msra.mxu0 0.0
    %1611 = vmatprep.subr.mxu0 0.0
    %1612 = vmatpush1.msra.mxu0 0.0
    %1613 = vmatprep.subr.mxu0 0.0
    %1614 = vmatpush1.msra.mxu0 0.0
    %1615 = vmatprep.subr.mxu0 0.0
    %1616 = vmatpush1.msra.mxu0 0.0
    %1617 = vmatprep.subr.mxu0 0.0
    %1618 = vmatpush1.msra.mxu0 0.0
    %1619 = vmatprep.subr.mxu0 0.0
    %1620 = vmatpush1.msra.mxu0 0.0
    %1621 = vmatprep.subr.mxu0 0.0
    %1622 = vmatpush1.msra.mxu0 0.0
    %1623 = vmatprep.mubr.f32.mxu0 0.0
    %1624 = vmatmul.mubr.f32.gmra.mrb[0].mxu0 %v1558
    %v1625 = vpop.f32.mrb[0].mxu0
    %v1626 = vadd.f32 0.0, %v1625
    %v1627 = vpop.f32.mrb[0].mxu0
    %v1628 = vadd.f32 0.0, %v1627
    %1629 = vdwg.mxu0
    %1630 = vmatprep.subr.mxu0 0.0
    %1631 = vmatpush1.msra.mxu0 %v365
    %1632 = vmatprep.subr.mxu0 0.0
    %1633 = vmatpush1.msra.mxu0 %v368
    %1634 = vmatprep.subr.mxu0 0.0
    %1635 = vmatpush1.msra.mxu0 %v371
    %1636 = vmatprep.subr.mxu0 0.0
    %1637 = vmatpush1.msra.mxu0 %v374
    %1638 = vmatprep.subr.mxu0 0.0
    %1639 = vmatpush1.msra.mxu0 %v377
    %1640 = vmatprep.subr.mxu0 0.0
    %1641 = vmatpush1.msra.mxu0 %v380
    %1642 = vmatprep.subr.mxu0 0.0
    %1643 = vmatpush1.msra.mxu0 %v383
    %1644 = vmatprep.subr.mxu0 0.0
    %1645 = vmatpush1.msra.mxu0 %v386
    %1646 = vmatprep.subr.mxu0 0.0
    %1647 = vmatpush1.msra.mxu0 %v389
    %1648 = vmatprep.subr.mxu0 0.0
    %1649 = vmatpush1.msra.mxu0 %v392
    %1650 = vmatprep.subr.mxu0 0.0
    %1651 = vmatpush1.msra.mxu0 %v395
    %1652 = vmatprep.subr.mxu0 0.0
    %1653 = vmatpush1.msra.mxu0 %v398
    %1654 = vmatprep.subr.mxu0 0.0
    %1655 = vmatpush1.msra.mxu0 %v401
    %1656 = vmatprep.subr.mxu0 0.0
    %1657 = vmatpush1.msra.mxu0 %v404
    %1658 = vmatprep.subr.mxu0 0.0
    %1659 = vmatpush1.msra.mxu0 %v407
    %1660 = vmatprep.subr.mxu0 0.0
    %1661 = vmatpush1.msra.mxu0 %v410
    %1662 = vmatprep.subr.mxu0 0.0
    %1663 = vmatpush1.msra.mxu0 0.0
    %1664 = vmatprep.subr.mxu0 0.0
    %1665 = vmatpush1.msra.mxu0 0.0
    %1666 = vmatprep.subr.mxu0 0.0
    %1667 = vmatpush1.msra.mxu0 0.0
    %1668 = vmatprep.subr.mxu0 0.0
    %1669 = vmatpush1.msra.mxu0 0.0
    %1670 = vmatprep.subr.mxu0 0.0
    %1671 = vmatpush1.msra.mxu0 0.0
    %1672 = vmatprep.subr.mxu0 0.0
    %1673 = vmatpush1.msra.mxu0 0.0
    %1674 = vmatprep.subr.mxu0 0.0
    %1675 = vmatpush1.msra.mxu0 0.0
    %1676 = vmatprep.subr.mxu0 0.0
    %1677 = vmatpush1.msra.mxu0 0.0
    %1678 = vmatprep.subr.mxu0 0.0
    %1679 = vmatpush1.msra.mxu0 0.0
    %1680 = vmatprep.subr.mxu0 0.0
    %1681 = vmatpush1.msra.mxu0 0.0
    %1682 = vmatprep.subr.mxu0 0.0
    %1683 = vmatpush1.msra.mxu0 0.0
    %1684 = vmatprep.subr.mxu0 0.0
    %1685 = vmatpush1.msra.mxu0 0.0
    %1686 = vmatprep.subr.mxu0 0.0
    %1687 = vmatpush1.msra.mxu0 0.0
    %1688 = vmatprep.subr.mxu0 0.0
    %1689 = vmatpush1.msra.mxu0 0.0
    %1690 = vmatprep.subr.mxu0 0.0
    %1691 = vmatpush1.msra.mxu0 0.0
    %1692 = vmatprep.subr.mxu0 0.0
    %1693 = vmatpush1.msra.mxu0 0.0
    %1694 = vmatprep.mubr.f32.mxu0 0.0
    %1695 = vmatmul.mubr.f32.gmra.mrb[0].mxu0 %v1558
    %v1696 = vpop.f32.mrb[0].mxu0
    %v1697 = vadd.f32 0.0, %v1696
    %v1698 = vpop.f32.mrb[0].mxu0
    %1699 = vdwg.mxu0
    %v1700 = vadd.f32 %v254, %v1626
    %v1701 = vxor.u32 %v1700, 2147483648
    %v1702 = vmul.f32 %v1701, 1.442695
    %v1703 = vpow.pop %v1702
    %v1704 = vadd.f32 %v1703, 1.0
    %v1705 = vrcp.pop %v1704
    %v1706 = vmul.f32 1.0, %v1705
    %v1707 = vadd.f32 %v256, %v1628
    %v1708 = vxor.u32 %v1707, 2147483648
    %v1709 = vmul.f32 %v1708, 1.442695
    %v1710 = vpow.pop %v1709
    %v1711 = vadd.f32 %v1710, 1.0
    %v1712 = vrcp.pop %v1711
    %v1713 = vmul.f32 1.0, %v1712
    %v1714 = vadd.f32 %v1697, %v416
    %v1715 = vmul.f32 %v1706, %v1714
    %v1716 = vadd.f32 %v360, %v1715
    %v1717 = vtanh.pop %v1716
    %v1718 = vsub.f32 1.0, %v1713
    %v1719 = vmul.f32 %v1718, %v1717
    %v1720 = vmul.f32 %v1713, %v1558
    %v1721 = vadd.f32 %v1719, %v1720
    %v1722 = vld [vmem:[%s5] sm:$0xff]
    %v1723 = vld [vmem:[%s5 + $0x8] sm:$0xff]
    %v1724 = vld [vmem:[%s5 + $0x10] sm:$0xff]
    %v1725 = vld [vmem:[%s5 + $0x18] sm:$0xff]
    %v1726 = vld [vmem:[%s5 + $0x20] sm:$0xff]
    %v1727 = vld [vmem:[%s5 + $0x28] sm:$0xff]
    %v1728 = vld [vmem:[%s5 + $0x30] sm:$0xff]
    %v1729 = vld [vmem:[%s5 + $0x38] sm:$0xff]
    %v1730 = vld [vmem:[%s5 + $0x40] sm:$0xff]
    %v1731 = vld [vmem:[%s5 + $0x48] sm:$0xff]
    %v1732 = vld [vmem:[%s5 + $0x50] sm:$0xff]
    %v1733 = vld [vmem:[%s5 + $0x58] sm:$0xff]
    %v1734 = vld [vmem:[%s5 + $0x60] sm:$0xff]
    %v1735 = vld [vmem:[%s5 + $0x68] sm:$0xff]
    %v1736 = vld [vmem:[%s5 + $0x70] sm:$0xff]
    %v1737 = vld [vmem:[%s5 + $0x78] sm:$0xff]
    %v1738 = vld [vmem:[%s6] sm:$0x1]
    %v1740 = vlaneseq
    %v1741 = vshrl.u32 %v1740, 7
    %v1742 = vsub.s32 0, %v1741
    %v1743 = vrot.slane %v1738, %v1742
    %1745 = vmatprep.subr.mxu0 0.0
    %1746 = vmatpush1.msra.mxu0 %v1722
    %1747 = vmatprep.subr.mxu0 0.0
    %1748 = vmatpush1.msra.mxu0 %v1723
    %1749 = vmatprep.subr.mxu0 0.0
    %1750 = vmatpush1.msra.mxu0 %v1724
    %1751 = vmatprep.subr.mxu0 0.0
    %1752 = vmatpush1.msra.mxu0 %v1725
    %1753 = vmatprep.subr.mxu0 0.0
    %1754 = vmatpush1.msra.mxu0 %v1726
    %1755 = vmatprep.subr.mxu0 0.0
    %1756 = vmatpush1.msra.mxu0 %v1727
    %1757 = vmatprep.subr.mxu0 0.0
    %1758 = vmatpush1.msra.mxu0 %v1728
    %1759 = vmatprep.subr.mxu0 0.0
    %1760 = vmatpush1.msra.mxu0 %v1729
    %1761 = vmatprep.subr.mxu0 0.0
    %1762 = vmatpush1.msra.mxu0 %v1730
    %1763 = vmatprep.subr.mxu0 0.0
    %1764 = vmatpush1.msra.mxu0 %v1731
    %1765 = vmatprep.subr.mxu0 0.0
    %1766 = vmatpush1.msra.mxu0 %v1732
    %1767 = vmatprep.subr.mxu0 0.0
    %1768 = vmatpush1.msra.mxu0 %v1733
    %1769 = vmatprep.subr.mxu0 0.0
    %1770 = vmatpush1.msra.mxu0 %v1734
    %1771 = vmatprep.subr.mxu0 0.0
    %1772 = vmatpush1.msra.mxu0 %v1735
    %1773 = vmatprep.subr.mxu0 0.0
    %1774 = vmatpush1.msra.mxu0 %v1736
    %1775 = vmatprep.subr.mxu0 0.0
    %1776 = vmatpush1.msra.mxu0 %v1737
    %1777 = vmatprep.subr.mxu0 0.0
    %1778 = vmatpush1.msra.mxu0 0.0
    %1779 = vmatprep.subr.mxu0 0.0
    %1780 = vmatpush1.msra.mxu0 0.0
    %1781 = vmatprep.subr.mxu0 0.0
    %1782 = vmatpush1.msra.mxu0 0.0
    %1783 = vmatprep.subr.mxu0 0.0
    %1784 = vmatpush1.msra.mxu0 0.0
    %1785 = vmatprep.subr.mxu0 0.0
    %1786 = vmatpush1.msra.mxu0 0.0
    %1787 = vmatprep.subr.mxu0 0.0
    %1788 = vmatpush1.msra.mxu0 0.0
    %1789 = vmatprep.subr.mxu0 0.0
    %1790 = vmatpush1.msra.mxu0 0.0
    %1791 = vmatprep.subr.mxu0 0.0
    %1792 = vmatpush1.msra.mxu0 0.0
    %1793 = vmatprep.subr.mxu0 0.0
    %1794 = vmatpush1.msra.mxu0 0.0
    %1795 = vmatprep.subr.mxu0 0.0
    %1796 = vmatpush1.msra.mxu0 0.0
    %1797 = vmatprep.subr.mxu0 0.0
    %1798 = vmatpush1.msra.mxu0 0.0
    %1799 = vmatprep.subr.mxu0 0.0
    %1800 = vmatpush1.msra.mxu0 0.0
    %1801 = vmatprep.subr.mxu0 0.0
    %1802 = vmatpush1.msra.mxu0 0.0
    %1803 = vmatprep.subr.mxu0 0.0
    %1804 = vmatpush1.msra.mxu0 0.0
    %1805 = vmatprep.subr.mxu0 0.0
    %1806 = vmatpush1.msra.mxu0 0.0
    %1807 = vmatprep.subr.mxu0 0.0
    %1808 = vmatpush1.msra.mxu0 0.0
    %1809 = vmatprep.mubr.f32.mxu0 0.0
    %1810 = vmatmul.mubr.f32.gmra.mrb[0].mxu0 %v1721
    %v1811 = vpop.f32.mrb[0].mxu0
    %v1812 = vadd.f32 %v1743, %v1811
    %v1813 = vpop.f32.mrb[0].mxu0
    %1814 = vdwg.mxu0
    %vm1815 = vcmask 334848
    %1816 = vst.msk [vmem:[#allocation7] sm:$0xff] %vm1815, %v1812
    // Predicated region
    $region38: #{tpu_custom_call.1} parent=1 // pred_check
      _
    $region39: #{tpu_custom_call.1} parent=1 // pred_check_branch
      %1818 = sbr.rel (0) target = $region41
    $region40: #{tpu_custom_call.1} parent=1 // pred_region
      %s1820 = ssub.s32 128, 128
      %1821 = vsyncadd [#allocation4], %s1820
      %s1823 = sshll.u32 [#allocation7], 4
      %s1824 = int_to_ptr.vmem [resolvable:$true] %s1823
      %1826 = dma.vmem_to_hbm [thread:$0]  %s1824, 128, %s7, [#allocation4]
    $region41: #{tpu_custom_call.1} parent=1 // pred_fallthru
      _
    // Predicated region
    $region42: #{tpu_custom_call.1} parent=1 // pred_check
      _
    $region43: #{tpu_custom_call.1} parent=1 // pred_check_branch
      %1828 = sbr.rel (0) target = $region45
    $region44: #{tpu_custom_call.1} parent=1 // pred_region
      %1829 = dma.done [#allocation4], 128
    $region45: #{tpu_custom_call.1} parent=1 // pred_fallthru
      _
    %1830 = vsyncpa [#allocation3], 1
    %1831 = vsyncpa [#allocation6], 1
    %1832 = vsyncpa [#allocation4], 1

</llo_original>
